<compile_context>
chip_gen: v5e
topology: v5e:2x2
jax: 0.10.0
libtpu: 0.0.40
codegen_flags: <defaults>
</compile_context>

<pallas_src>
import numpy as np
import jax
import jax.numpy as jnp
from jax.experimental import pallas as pl
from jax.experimental.pallas import tpu as pltpu


def _round_up(x, m):
    return ((x + m - 1) // m) * m


def _lstm_block_kernel(len_ref, gx_ref, whh_ref, out_ref, h_ref, c_ref):
    """One grid step == T_BLK masked-LSTM time steps for one batch block.

    len_ref : [B_BLK, 1]            int32  sequence lengths (padded rows = 0)
    gx_ref  : [T_BLK, 4, B_BLK, Hp] bf16   per-gate x@W_ih^T + b (lane-padded)
    whh_ref : [4, Hp, Hp]           bf16   per-gate recurrent weights (h-major)
    out_ref : [B_BLK, T_BLK, Hp]    f32    batch-major total_hiddens slab
    h_ref   : [B_BLK, Hp]           f32    hidden carry / final hidden
    c_ref   : [B_BLK, Hp]           f32    cell carry   / final cell
    """
    tb = pl.program_id(1)                     # serial time-block index
    t_blk = gx_ref.shape[0]

    # init_state == zeros (matches torch.zeros init_state in the reference)
    @pl.when(tb == 0)
    def _init():
        h_ref[...] = jnp.zeros_like(h_ref)
        c_ref[...] = jnp.zeros_like(c_ref)

    h = h_ref[...]                            # [B_BLK, Hp] carried across steps
    c = c_ref[...]
    lens = len_ref[...]                       # [B_BLK, 1] int32
    # per-gate recurrent weights, loaded once per block (lane-aligned tiles)
    w_i, w_f, w_g, w_o = whh_ref[0], whh_ref[1], whh_ref[2], whh_ref[3]
    t_base = tb * t_blk

    def sigm(x):
        # tanh-form sigmoid: one EUP push per call instead of exp + reciprocal
        return 0.5 * jnp.tanh(0.5 * x) + 0.5

    # Fully-unrolled recurrence over the time block (static trip count).
    for i in range(t_blk):
        hb = h.astype(jnp.bfloat16)           # bf16 MXU operands, f32 accumulate
        g_i = gx_ref[i, 0].astype(jnp.float32) + jnp.dot(
            hb, w_i, preferred_element_type=jnp.float32)
        g_f = gx_ref[i, 1].astype(jnp.float32) + jnp.dot(
            hb, w_f, preferred_element_type=jnp.float32)
        g_g = gx_ref[i, 2].astype(jnp.float32) + jnp.dot(
            hb, w_g, preferred_element_type=jnp.float32)
        g_o = gx_ref[i, 3].astype(jnp.float32) + jnp.dot(
            hb, w_o, preferred_element_type=jnp.float32)

        i_t = sigm(g_i)
        f_t = sigm(g_f)
        g_t = jnp.tanh(g_g)
        o_t = sigm(g_o)

        c_new = f_t * c + i_t * g_t
        h_new = o_t * jnp.tanh(c_new)

        # active rows at global step t = t_base + i: seq_len > t
        mask = lens > (t_base + i)            # [B_BLK, 1] bool
        h = jnp.where(mask, h_new, h)
        c = jnp.where(mask, c_new, c)
        # inactive rows of total_hiddens stay zero; batch-major lane-dense store
        # removes the wrapper-side output transpose HBM pass.
        out_ref[:, i, :] = jnp.where(mask, h_new, 0.0)

    # single carry write-back per block (not per time step)
    h_ref[...] = h
    c_ref[...] = c


def my_encoder_ver3_forward(seq, seq_len, params, t_blk=16, max_len=None):
    """seq: [B, S, E] f32, seq_len: [B] int, params: raw LSTM-cell weights.

    Returns (total_hiddens [B, max_len, H], [h [1,B,H], c [1,B,H]]).
    """
    B, S, E = seq.shape
    H = params["w_hh"].shape[1]

    if max_len is None:
        # NOTE: host-side max() forces seq_len concrete (blocks jit of the
        # wrapper and recompiles per distinct length). Pass a static max_len
        # (e.g. S) from the caller to keep the wrapper jit-friendly.
        seq_len_np = np.asarray(seq_len)
        max_len = int(seq_len_np.max()) if seq_len_np.size else 0

    if max_len == 0:
        z = jnp.zeros((1, B, H), jnp.float32)
        return jnp.zeros((B, 0, H), jnp.float32), [z, z]

    Hp = _round_up(H, 128)                    # lane-dense gate / hidden tiles
    # Batch blocking: pack rows up to 128 for MXU M-utilization; for B > 128 the
    # extra leading "parallel" grid axis lets v7x megacore shard batch blocks.
    B_blk = _round_up(B, 16) if B <= 128 else 128
    B_pad = _round_up(B, B_blk)
    n_b = B_pad // B_blk

    t_blk = max(8, _round_up(min(t_blk, max_len), 8))
    n_t = pl.cdiv(max_len, t_blk)
    T_pad = n_t * t_blk

    # ---- kernel-facing weight layout: per-gate, lane-padded ------------------
    w_ih = params["w_ih"].astype(jnp.float32)                     # [4H, E] (i,f,g,o)
    w_hh = params["w_hh"].astype(jnp.float32)                     # [4H, H]
    bias = (params["b_ih"] + params["b_hh"]).astype(jnp.float32)  # [4H]

    w_ih_g = jnp.transpose(w_ih.reshape(4, H, E), (0, 2, 1))      # [4, E, H]
    w_ih_g = jnp.pad(w_ih_g, ((0, 0), (0, 0), (0, Hp - H)))       # [4, E, Hp]
    bias_g = jnp.pad(bias.reshape(4, H), ((0, 0), (0, Hp - H)))   # [4, Hp]

    w_hh_g = jnp.transpose(w_hh.reshape(4, H, H), (0, 2, 1))      # [4, H_in, H_out]
    w_hh_g = jnp.pad(w_hh_g, ((0, 0), (0, Hp - H), (0, Hp - H)))
    w_hh_g = w_hh_g.astype(jnp.bfloat16)                          # [4, Hp, Hp]

    # ---- hoisted input projection: one big MXU matmul over all time steps ----
    seq_t = seq[:, :max_len, :].astype(jnp.float32)               # [B, T, E]
    gx = jnp.einsum("bte,geh->tgbh", seq_t, w_ih_g) + bias_g[None, :, None, :]
    gx = jnp.pad(gx, ((0, T_pad - max_len), (0, 0), (0, B_pad - B), (0, 0)))
    gx = gx.astype(jnp.bfloat16)              # halve the dominant HBM stream

    lens = jnp.asarray(seq_len, jnp.int32).reshape(B, 1)
    lens = jnp.pad(lens, ((0, B_pad - B), (0, 0)))                # padded rows inert

    out_shapes = (
        jax.ShapeDtypeStruct((B_pad, T_pad, Hp), jnp.float32),    # total_hiddens
        jax.ShapeDtypeStruct((B_pad, Hp), jnp.float32),           # final h
        jax.ShapeDtypeStruct((B_pad, Hp), jnp.float32),           # final c
    )

    total_pad, h_pad, c_pad = pl.pallas_call(
        _lstm_block_kernel,
        grid=(n_b, n_t),                      # (batch: parallel, time: serial)
        in_specs=[
            pl.BlockSpec((B_blk, 1), lambda b, t: (b, 0)),              # seq_len
            pl.BlockSpec((t_blk, 4, B_blk, Hp), lambda b, t: (t, 0, b, 0)),  # gates_x
            # Constant-index block: DMA fires only on the first step.
            # TODO(synk): at production H, single-buffer this (pipeline_mode=
            # pl.Buffered(1)) or DMA once into VMEM scratch to save VMEM on v7x.
            pl.BlockSpec((4, Hp, Hp), lambda b, t: (0, 0, 0)),          # W_hh
        ],
        out_specs=[
            pl.BlockSpec((B_blk, t_blk, Hp), lambda b, t: (b, t, 0)),   # total
            pl.BlockSpec((B_blk, Hp), lambda b, t: (b, 0)),             # h carry
            pl.BlockSpec((B_blk, Hp), lambda b, t: (b, 0)),             # c carry
        ],
        out_shape=out_shapes,
        compiler_params=pltpu.CompilerParams(
            dimension_semantics=("parallel", "arbitrary"),
            vmem_limit_bytes=64 * 1024 * 1024),
    )(lens, gx, w_hh_g)

    total_hiddens = total_pad[:B, :max_len, :H]                   # already batch-major
    final_state = [h_pad[None, :B, :H], c_pad[None, :B, :H]]      # nMem x [1, B, H]
    return total_hiddens, final_state


def _reference_forward(seq, seq_len, params):
    """Pure-JAX f32 reference (masked LSTM) for correctness checking."""
    B, S, E = seq.shape
    H = params["w_hh"].shape[1]
    max_len = int(np.max(np.asarray(seq_len)))
    lens = jnp.asarray(seq_len, jnp.int32)
    w_ih_t = params["w_ih"].T
    w_hh_t = params["w_hh"].T
    b = params["b_ih"] + params["b_hh"]

    def step(carry, xt):
        h, c = carry
        x_t, t = xt
        gates = x_t @ w_ih_t + h @ w_hh_t + b
        i_t = jax.nn.sigmoid(gates[:, 0 * H:1 * H])
        f_t = jax.nn.sigmoid(gates[:, 1 * H:2 * H])
        g_t = jnp.tanh(gates[:, 2 * H:3 * H])
        o_t = jax.nn.sigmoid(gates[:, 3 * H:4 * H])
        c_new = f_t * c + i_t * g_t
        h_new = o_t * jnp.tanh(c_new)
        m = (lens > t)[:, None]
        return ((jnp.where(m, h_new, h), jnp.where(m, c_new, c)),
                jnp.where(m, h_new, 0.0))

    h0 = jnp.zeros((B, H), jnp.float32)
    c0 = jnp.zeros((B, H), jnp.float32)
    seq_tm = jnp.transpose(seq[:, :max_len, :].astype(jnp.float32), (1, 0, 2))
    (hf, cf), outs = jax.lax.scan(step, (h0, c0),
                                  (seq_tm, jnp.arange(max_len, dtype=jnp.int32)))
    return jnp.transpose(outs, (1, 0, 2)), [hf[None], cf[None]]


def make_params(key, embed_size, hidden_size):
    """Deterministic PyTorch-LSTMCell-style init: U(-1/sqrt(H), 1/sqrt(H))."""
    k1, k2, k3, k4 = jax.random.split(key, 4)
    bound = 1.0 / np.sqrt(hidden_size)
    return {
        "w_ih": jax.random.uniform(k1, (4 * hidden_size, embed_size),
                                   jnp.float32, -bound, bound),
        "w_hh": jax.random.uniform(k2, (4 * hidden_size, hidden_size),
                                   jnp.float32, -bound, bound),
        "b_ih": jax.random.uniform(k3, (4 * hidden_size,), jnp.float32,
                                   -bound, bound),
        "b_hh": jax.random.uniform(k4, (4 * hidden_size,), jnp.float32,
                                   -bound, bound),
    }


if __name__ == "__main__":
    B, S, E, H = 4, 8, 32, 32

    key = jax.random.PRNGKey(0)
    k_seq, k_par = jax.random.split(key)
    seq = jax.random.normal(k_seq, (B, S, E), jnp.float32)
    seq_len = jnp.array([5, 8, 3, 6], dtype=jnp.int32)     # variable lengths <= S
    params = make_params(k_par, E, H)

    total, (h_fin, c_fin) = my_encoder_ver3_forward(seq, seq_len, params)
    jax.block_until_ready(total)
    jax.block_until_ready(h_fin)
    jax.block_until_ready(c_fin)

    # correctness check vs pure-JAX f32 reference (bf16 gx / bf16 matmul inside
    # the kernel -> use a bf16-appropriate tolerance)
    ref_total, (ref_h, ref_c) = _reference_forward(seq, seq_len, params)
    assert np.allclose(np.asarray(total), np.asarray(ref_total), atol=2e-2), "total mismatch"
    assert np.allclose(np.asarray(h_fin), np.asarray(ref_h), atol=2e-2), "h mismatch"
    assert np.allclose(np.asarray(c_fin), np.asarray(ref_c), atol=2e-2), "c mismatch"

    print("KERNEL_OK")
</pallas_src>

<mosaic_0001>
module attributes {stable_mosaic.version = 11 : i64} {
  func.func @_lstm_block_kernel(%arg0: i32, %arg1: i32, %arg2: memref<16x1xi32, #tpu.memory_space<vmem>>, %arg3: memref<8x4x16x128xbf16, #tpu.memory_space<vmem>>, %arg4: memref<4x128x128xbf16, #tpu.memory_space<vmem>>, %arg5: memref<16x8x128xf32, #tpu.memory_space<vmem>>, %arg6: memref<16x128xf32, #tpu.memory_space<vmem>>, %arg7: memref<16x128xf32, #tpu.memory_space<vmem>>) attributes {dimension_semantics = [#tpu.dimension_semantics<parallel>, #tpu.dimension_semantics<arbitrary>], iteration_bounds = array<i64: 1, 1>, scalar_prefetch = 0 : i64, scratch_operands = 0 : i64, tpu.core_type = #tpu.core_type<tc>, window_params = [{transform_indices = @transform_0, window_bounds = array<i64: 16, 1>}, {transform_indices = @transform_1, window_bounds = array<i64: 8, 4, 16, 128>}, {pipeline_mode = #tpu.pipeline_mode<synchronous>, transform_indices = @transform_2, window_bounds = array<i64: 4, 128, 128>}, {transform_indices = @transform_3, window_bounds = array<i64: 16, 8, 128>}, {transform_indices = @transform_4, window_bounds = array<i64: 16, 128>}, {transform_indices = @transform_5, window_bounds = array<i64: 16, 128>}]} {
    %c0_i32 = arith.constant 0 : i32
    %0 = arith.cmpi eq, %arg1, %c0_i32 : i32
    %1 = arith.extui %0 : i1 to i32
    %c0_i32_0 = arith.constant 0 : i32
    %2 = arith.cmpi ne, %1, %c0_i32_0 : i32
    scf.if %2 {
      %cst_279 = arith.constant 0.000000e+00 : f32
      %529 = vector.broadcast %cst_279 : f32 to vector<16x128xf32>
      %c0_280 = arith.constant 0 : index
      %c0_281 = arith.constant 0 : index
      %530 = vector.load %arg6[%c0_280, %c0_281] : memref<16x128xf32, #tpu.memory_space<vmem>>, vector<16x128xf32>
      tpu.vector_store %arg6[%c0_280, %c0_281], %529 {strides = array<i32>} : memref<16x128xf32, #tpu.memory_space<vmem>>, vector<16x128xf32>,
      %cst_282 = arith.constant 0.000000e+00 : f32
      %531 = vector.broadcast %cst_282 : f32 to vector<16x128xf32>
      %c0_283 = arith.constant 0 : index
      %c0_284 = arith.constant 0 : index
      %532 = vector.load %arg7[%c0_283, %c0_284] : memref<16x128xf32, #tpu.memory_space<vmem>>, vector<16x128xf32>
      tpu.vector_store %arg7[%c0_283, %c0_284], %531 {strides = array<i32>} : memref<16x128xf32, #tpu.memory_space<vmem>>, vector<16x128xf32>,
    } else {
    }
    %c0 = arith.constant 0 : index
    %c0_1 = arith.constant 0 : index
    %3 = vector.load %arg6[%c0, %c0_1] : memref<16x128xf32, #tpu.memory_space<vmem>>, vector<16x128xf32>
    %c0_2 = arith.constant 0 : index
    %c0_3 = arith.constant 0 : index
    %4 = vector.load %arg7[%c0_2, %c0_3] : memref<16x128xf32, #tpu.memory_space<vmem>>, vector<16x128xf32>
    %c0_4 = arith.constant 0 : index
    %c0_5 = arith.constant 0 : index
    %5 = vector.load %arg2[%c0_4, %c0_5] : memref<16x1xi32, #tpu.memory_space<vmem>>, vector<16x1xi32>
    %c0_6 = arith.constant 0 : index
    %c0_7 = arith.constant 0 : index
    %c0_8 = arith.constant 0 : index
    %6 = vector.load %arg4[%c0_6, %c0_7, %c0_8] : memref<4x128x128xbf16, #tpu.memory_space<vmem>>, vector<1x128x128xbf16>
    %7 = vector.shape_cast %6 : vector<1x128x128xbf16> to vector<128x128xbf16>
    %c1 = arith.constant 1 : index
    %c0_9 = arith.constant 0 : index
    %c0_10 = arith.constant 0 : index
    %8 = vector.load %arg4[%c1, %c0_9, %c0_10] : memref<4x128x128xbf16, #tpu.memory_space<vmem>>, vector<1x128x128xbf16>
    %9 = vector.shape_cast %8 : vector<1x128x128xbf16> to vector<128x128xbf16>
    %c2 = arith.constant 2 : index
    %c0_11 = arith.constant 0 : index
    %c0_12 = arith.constant 0 : index
    %10 = vector.load %arg4[%c2, %c0_11, %c0_12] : memref<4x128x128xbf16, #tpu.memory_space<vmem>>, vector<1x128x128xbf16>
    %11 = vector.shape_cast %10 : vector<1x128x128xbf16> to vector<128x128xbf16>
    %c3 = arith.constant 3 : index
    %c0_13 = arith.constant 0 : index
    %c0_14 = arith.constant 0 : index
    %12 = vector.load %arg4[%c3, %c0_13, %c0_14] : memref<4x128x128xbf16, #tpu.memory_space<vmem>>, vector<1x128x128xbf16>
    %13 = vector.shape_cast %12 : vector<1x128x128xbf16> to vector<128x128xbf16>
    %c8_i32 = arith.constant 8 : i32
    %14 = arith.muli %arg1, %c8_i32 : i32
    %15 = arith.truncf %3 : vector<16x128xf32> to vector<16x128xbf16>
    %c0_15 = arith.constant 0 : index
    %c0_16 = arith.constant 0 : index
    %c0_17 = arith.constant 0 : index
    %c0_18 = arith.constant 0 : index
    %16 = vector.load %arg3[%c0_15, %c0_16, %c0_17, %c0_18] : memref<8x4x16x128xbf16, #tpu.memory_space<vmem>>, vector<1x1x16x128xbf16>
    %17 = vector.shape_cast %16 : vector<1x1x16x128xbf16> to vector<16x128xbf16>
    %18 = arith.extf %17 : vector<16x128xbf16> to vector<16x128xf32>
    %cst = arith.constant dense<0.000000e+00> : vector<16x128xf32>
    %19 = tpu.matmul %15, %7, %cst {dimension_numbers = #tpu.dot_dimension_numbers<[1], [0], [0], [1], [0, 0, 1, 1], [], []>} : vector<16x128xbf16>, vector<128x128xbf16>, vector<16x128xf32> -> vector<16x128xf32>
    %20 = arith.addf %18, %19 : vector<16x128xf32>
    %c0_19 = arith.constant 0 : index
    %c1_20 = arith.constant 1 : index
    %c0_21 = arith.constant 0 : index
    %c0_22 = arith.constant 0 : index
    %21 = vector.load %arg3[%c0_19, %c1_20, %c0_21, %c0_22] : memref<8x4x16x128xbf16, #tpu.memory_space<vmem>>, vector<1x1x16x128xbf16>
    %22 = vector.shape_cast %21 : vector<1x1x16x128xbf16> to vector<16x128xbf16>
    %23 = arith.extf %22 : vector<16x128xbf16> to vector<16x128xf32>
    %cst_23 = arith.constant dense<0.000000e+00> : vector<16x128xf32>
    %24 = tpu.matmul %15, %9, %cst_23 {dimension_numbers = #tpu.dot_dimension_numbers<[1], [0], [0], [1], [0, 0, 1, 1], [], []>} : vector<16x128xbf16>, vector<128x128xbf16>, vector<16x128xf32> -> vector<16x128xf32>
    %25 = arith.addf %23, %24 : vector<16x128xf32>
    %c0_24 = arith.constant 0 : index
    %c2_25 = arith.constant 2 : index
    %c0_26 = arith.constant 0 : index
    %c0_27 = arith.constant 0 : index
    %26 = vector.load %arg3[%c0_24, %c2_25, %c0_26, %c0_27] : memref<8x4x16x128xbf16, #tpu.memory_space<vmem>>, vector<1x1x16x128xbf16>
    %27 = vector.shape_cast %26 : vector<1x1x16x128xbf16> to vector<16x128xbf16>
    %28 = arith.extf %27 : vector<16x128xbf16> to vector<16x128xf32>
    %cst_28 = arith.constant dense<0.000000e+00> : vector<16x128xf32>
    %29 = tpu.matmul %15, %11, %cst_28 {dimension_numbers = #tpu.dot_dimension_numbers<[1], [0], [0], [1], [0, 0, 1, 1], [], []>} : vector<16x128xbf16>, vector<128x128xbf16>, vector<16x128xf32> -> vector<16x128xf32>
    %30 = arith.addf %28, %29 : vector<16x128xf32>
    %c0_29 = arith.constant 0 : index
    %c3_30 = arith.constant 3 : index
    %c0_31 = arith.constant 0 : index
    %c0_32 = arith.constant 0 : index
    %31 = vector.load %arg3[%c0_29, %c3_30, %c0_31, %c0_32] : memref<8x4x16x128xbf16, #tpu.memory_space<vmem>>, vector<1x1x16x128xbf16>
    %32 = vector.shape_cast %31 : vector<1x1x16x128xbf16> to vector<16x128xbf16>
    %33 = arith.extf %32 : vector<16x128xbf16> to vector<16x128xf32>
    %cst_33 = arith.constant dense<0.000000e+00> : vector<16x128xf32>
    %34 = tpu.matmul %15, %13, %cst_33 {dimension_numbers = #tpu.dot_dimension_numbers<[1], [0], [0], [1], [0, 0, 1, 1], [], []>} : vector<16x128xbf16>, vector<128x128xbf16>, vector<16x128xf32> -> vector<16x128xf32>
    %35 = arith.addf %33, %34 : vector<16x128xf32>
    %cst_34 = arith.constant 5.000000e-01 : f32
    %36 = vector.broadcast %cst_34 : f32 to vector<16x128xf32>
    %37 = arith.mulf %36, %20 : vector<16x128xf32>
    %38 = math.tanh %37 : vector<16x128xf32>
    %cst_35 = arith.constant 5.000000e-01 : f32
    %39 = vector.broadcast %cst_35 : f32 to vector<16x128xf32>
    %40 = arith.mulf %39, %38 : vector<16x128xf32>
    %cst_36 = arith.constant 5.000000e-01 : f32
    %41 = vector.broadcast %cst_36 : f32 to vector<16x128xf32>
    %42 = arith.addf %40, %41 : vector<16x128xf32>
    %cst_37 = arith.constant 5.000000e-01 : f32
    %43 = vector.broadcast %cst_37 : f32 to vector<16x128xf32>
    %44 = arith.mulf %43, %25 : vector<16x128xf32>
    %45 = math.tanh %44 : vector<16x128xf32>
    %cst_38 = arith.constant 5.000000e-01 : f32
    %46 = vector.broadcast %cst_38 : f32 to vector<16x128xf32>
    %47 = arith.mulf %46, %45 : vector<16x128xf32>
    %cst_39 = arith.constant 5.000000e-01 : f32
    %48 = vector.broadcast %cst_39 : f32 to vector<16x128xf32>
    %49 = arith.addf %47, %48 : vector<16x128xf32>
    %50 = math.tanh %30 : vector<16x128xf32>
    %cst_40 = arith.constant 5.000000e-01 : f32
    %51 = vector.broadcast %cst_40 : f32 to vector<16x128xf32>
    %52 = arith.mulf %51, %35 : vector<16x128xf32>
    %53 = math.tanh %52 : vector<16x128xf32>
    %cst_41 = arith.constant 5.000000e-01 : f32
    %54 = vector.broadcast %cst_41 : f32 to vector<16x128xf32>
    %55 = arith.mulf %54, %53 : vector<16x128xf32>
    %cst_42 = arith.constant 5.000000e-01 : f32
    %56 = vector.broadcast %cst_42 : f32 to vector<16x128xf32>
    %57 = arith.addf %55, %56 : vector<16x128xf32>
    %58 = arith.mulf %49, %4 : vector<16x128xf32>
    %59 = arith.mulf %42, %50 : vector<16x128xf32>
    %60 = arith.addf %58, %59 : vector<16x128xf32>
    %61 = math.tanh %60 : vector<16x128xf32>
    %62 = arith.mulf %57, %61 : vector<16x128xf32>
    %c0_i32_43 = arith.constant 0 : i32
    %63 = arith.addi %14, %c0_i32_43 : i32
    %64 = vector.broadcast %63 : i32 to vector<16x1xi32>
    %65 = arith.cmpi sgt, %5, %64 : vector<16x1xi32>
    %66 = vector.shape_cast %65 : vector<16x1xi1> to vector<16x1xi1>
    %67 = vector.broadcast %66 : vector<16x1xi1> to vector<16x128xi1>
    %68 = arith.select %67, %62, %3 : vector<16x128xi1>, vector<16x128xf32>
    %69 = vector.shape_cast %65 : vector<16x1xi1> to vector<16x1xi1>
    %70 = vector.broadcast %69 : vector<16x1xi1> to vector<16x128xi1>
    %71 = arith.select %70, %60, %4 : vector<16x128xi1>, vector<16x128xf32>
    %cst_44 = arith.constant 0.000000e+00 : f32
    %72 = vector.shape_cast %65 : vector<16x1xi1> to vector<16x1xi1>
    %73 = vector.broadcast %72 : vector<16x1xi1> to vector<16x128xi1>
    %74 = vector.broadcast %cst_44 : f32 to vector<16x128xf32>
    %75 = arith.select %73, %62, %74 : vector<16x128xi1>, vector<16x128xf32>
    %c0_45 = arith.constant 0 : index
    %c0_46 = arith.constant 0 : index
    %c0_47 = arith.constant 0 : index
    %76 = vector.load %arg5[%c0_45, %c0_46, %c0_47] : memref<16x8x128xf32, #tpu.memory_space<vmem>>, vector<16x1x128xf32>
    %77 = vector.shape_cast %76 : vector<16x1x128xf32> to vector<16x128xf32>
    %78 = vector.shape_cast %75 : vector<16x128xf32> to vector<16x1x128xf32>
    tpu.vector_store %arg5[%c0_45, %c0_46, %c0_47], %78 {strides = array<i32>} : memref<16x8x128xf32, #tpu.memory_space<vmem>>, vector<16x1x128xf32>,
    %79 = arith.truncf %68 : vector<16x128xf32> to vector<16x128xbf16>
    %c1_48 = arith.constant 1 : index
    %c0_49 = arith.constant 0 : index
    %c0_50 = arith.constant 0 : index
    %c0_51 = arith.constant 0 : index
    %80 = vector.load %arg3[%c1_48, %c0_49, %c0_50, %c0_51] : memref<8x4x16x128xbf16, #tpu.memory_space<vmem>>, vector<1x1x16x128xbf16>
    %81 = vector.shape_cast %80 : vector<1x1x16x128xbf16> to vector<16x128xbf16>
    %82 = arith.extf %81 : vector<16x128xbf16> to vector<16x128xf32>
    %cst_52 = arith.constant dense<0.000000e+00> : vector<16x128xf32>
    %83 = tpu.matmul %79, %7, %cst_52 {dimension_numbers = #tpu.dot_dimension_numbers<[1], [0], [0], [1], [0, 0, 1, 1], [], []>} : vector<16x128xbf16>, vector<128x128xbf16>, vector<16x128xf32> -> vector<16x128xf32>
    %84 = arith.addf %82, %83 : vector<16x128xf32>
    %c1_53 = arith.constant 1 : index
    %c1_54 = arith.constant 1 : index
    %c0_55 = arith.constant 0 : index
    %c0_56 = arith.constant 0 : index
    %85 = vector.load %arg3[%c1_53, %c1_54, %c0_55, %c0_56] : memref<8x4x16x128xbf16, #tpu.memory_space<vmem>>, vector<1x1x16x128xbf16>
    %86 = vector.shape_cast %85 : vector<1x1x16x128xbf16> to vector<16x128xbf16>
    %87 = arith.extf %86 : vector<16x128xbf16> to vector<16x128xf32>
    %cst_57 = arith.constant dense<0.000000e+00> : vector<16x128xf32>
    %88 = tpu.matmul %79, %9, %cst_57 {dimension_numbers = #tpu.dot_dimension_numbers<[1], [0], [0], [1], [0, 0, 1, 1], [], []>} : vector<16x128xbf16>, vector<128x128xbf16>, vector<16x128xf32> -> vector<16x128xf32>
    %89 = arith.addf %87, %88 : vector<16x128xf32>
    %c1_58 = arith.constant 1 : index
    %c2_59 = arith.constant 2 : index
    %c0_60 = arith.constant 0 : index
    %c0_61 = arith.constant 0 : index
    %90 = vector.load %arg3[%c1_58, %c2_59, %c0_60, %c0_61] : memref<8x4x16x128xbf16, #tpu.memory_space<vmem>>, vector<1x1x16x128xbf16>
    %91 = vector.shape_cast %90 : vector<1x1x16x128xbf16> to vector<16x128xbf16>
    %92 = arith.extf %91 : vector<16x128xbf16> to vector<16x128xf32>
    %cst_62 = arith.constant dense<0.000000e+00> : vector<16x128xf32>
    %93 = tpu.matmul %79, %11, %cst_62 {dimension_numbers = #tpu.dot_dimension_numbers<[1], [0], [0], [1], [0, 0, 1, 1], [], []>} : vector<16x128xbf16>, vector<128x128xbf16>, vector<16x128xf32> -> vector<16x128xf32>
    %94 = arith.addf %92, %93 : vector<16x128xf32>
    %c1_63 = arith.constant 1 : index
    %c3_64 = arith.constant 3 : index
    %c0_65 = arith.constant 0 : index
    %c0_66 = arith.constant 0 : index
    %95 = vector.load %arg3[%c1_63, %c3_64, %c0_65, %c0_66] : memref<8x4x16x128xbf16, #tpu.memory_space<vmem>>, vector<1x1x16x128xbf16>
    %96 = vector.shape_cast %95 : vector<1x1x16x128xbf16> to vector<16x128xbf16>
    %97 = arith.extf %96 : vector<16x128xbf16> to vector<16x128xf32>
    %cst_67 = arith.constant dense<0.000000e+00> : vector<16x128xf32>
    %98 = tpu.matmul %79, %13, %cst_67 {dimension_numbers = #tpu.dot_dimension_numbers<[1], [0], [0], [1], [0, 0, 1, 1], [], []>} : vector<16x128xbf16>, vector<128x128xbf16>, vector<16x128xf32> -> vector<16x128xf32>
    %99 = arith.addf %97, %98 : vector<16x128xf32>
    %cst_68 = arith.constant 5.000000e-01 : f32
    %100 = vector.broadcast %cst_68 : f32 to vector<16x128xf32>
    %101 = arith.mulf %100, %84 : vector<16x128xf32>
    %102 = math.tanh %101 : vector<16x128xf32>
    %cst_69 = arith.constant 5.000000e-01 : f32
    %103 = vector.broadcast %cst_69 : f32 to vector<16x128xf32>
    %104 = arith.mulf %103, %102 : vector<16x128xf32>
    %cst_70 = arith.constant 5.000000e-01 : f32
    %105 = vector.broadcast %cst_70 : f32 to vector<16x128xf32>
    %106 = arith.addf %104, %105 : vector<16x128xf32>
    %cst_71 = arith.constant 5.000000e-01 : f32
    %107 = vector.broadcast %cst_71 : f32 to vector<16x128xf32>
    %108 = arith.mulf %107, %89 : vector<16x128xf32>
    %109 = math.tanh %108 : vector<16x128xf32>
    %cst_72 = arith.constant 5.000000e-01 : f32
    %110 = vector.broadcast %cst_72 : f32 to vector<16x128xf32>
    %111 = arith.mulf %110, %109 : vector<16x128xf32>
    %cst_73 = arith.constant 5.000000e-01 : f32
    %112 = vector.broadcast %cst_73 : f32 to vector<16x128xf32>
    %113 = arith.addf %111, %112 : vector<16x128xf32>
    %114 = math.tanh %94 : vector<16x128xf32>
    %cst_74 = arith.constant 5.000000e-01 : f32
    %115 = vector.broadcast %cst_74 : f32 to vector<16x128xf32>
    %116 = arith.mulf %115, %99 : vector<16x128xf32>
    %117 = math.tanh %116 : vector<16x128xf32>
    %cst_75 = arith.constant 5.000000e-01 : f32
    %118 = vector.broadcast %cst_75 : f32 to vector<16x128xf32>
    %119 = arith.mulf %118, %117 : vector<16x128xf32>
    %cst_76 = arith.constant 5.000000e-01 : f32
    %120 = vector.broadcast %cst_76 : f32 to vector<16x128xf32>
    %121 = arith.addf %119, %120 : vector<16x128xf32>
    %122 = arith.mulf %113, %71 : vector<16x128xf32>
    %123 = arith.mulf %106, %114 : vector<16x128xf32>
    %124 = arith.addf %122, %123 : vector<16x128xf32>
    %125 = math.tanh %124 : vector<16x128xf32>
    %126 = arith.mulf %121, %125 : vector<16x128xf32>
    %c1_i32 = arith.constant 1 : i32
    %127 = arith.addi %14, %c1_i32 : i32
    %128 = vector.broadcast %127 : i32 to vector<16x1xi32>
    %129 = arith.cmpi sgt, %5, %128 : vector<16x1xi32>
    %130 = vector.shape_cast %129 : vector<16x1xi1> to vector<16x1xi1>
    %131 = vector.broadcast %130 : vector<16x1xi1> to vector<16x128xi1>
    %132 = arith.select %131, %126, %68 : vector<16x128xi1>, vector<16x128xf32>
    %133 = vector.shape_cast %129 : vector<16x1xi1> to vector<16x1xi1>
    %134 = vector.broadcast %133 : vector<16x1xi1> to vector<16x128xi1>
    %135 = arith.select %134, %124, %71 : vector<16x128xi1>, vector<16x128xf32>
    %cst_77 = arith.constant 0.000000e+00 : f32
    %136 = vector.shape_cast %129 : vector<16x1xi1> to vector<16x1xi1>
    %137 = vector.broadcast %136 : vector<16x1xi1> to vector<16x128xi1>
    %138 = vector.broadcast %cst_77 : f32 to vector<16x128xf32>
    %139 = arith.select %137, %126, %138 : vector<16x128xi1>, vector<16x128xf32>
    %c0_78 = arith.constant 0 : index
    %c1_79 = arith.constant 1 : index
    %c0_80 = arith.constant 0 : index
    %140 = vector.load %arg5[%c0_78, %c1_79, %c0_80] : memref<16x8x128xf32, #tpu.memory_space<vmem>>, vector<16x1x128xf32>
    %141 = vector.shape_cast %140 : vector<16x1x128xf32> to vector<16x128xf32>
    %142 = vector.shape_cast %139 : vector<16x128xf32> to vector<16x1x128xf32>
    tpu.vector_store %arg5[%c0_78, %c1_79, %c0_80], %142 {strides = array<i32>} : memref<16x8x128xf32, #tpu.memory_space<vmem>>, vector<16x1x128xf32>,
    %143 = arith.truncf %132 : vector<16x128xf32> to vector<16x128xbf16>
    %c2_81 = arith.constant 2 : index
    %c0_82 = arith.constant 0 : index
    %c0_83 = arith.constant 0 : index
    %c0_84 = arith.constant 0 : index
    %144 = vector.load %arg3[%c2_81, %c0_82, %c0_83, %c0_84] : memref<8x4x16x128xbf16, #tpu.memory_space<vmem>>, vector<1x1x16x128xbf16>
    %145 = vector.shape_cast %144 : vector<1x1x16x128xbf16> to vector<16x128xbf16>
    %146 = arith.extf %145 : vector<16x128xbf16> to vector<16x128xf32>
    %cst_85 = arith.constant dense<0.000000e+00> : vector<16x128xf32>
    %147 = tpu.matmul %143, %7, %cst_85 {dimension_numbers = #tpu.dot_dimension_numbers<[1], [0], [0], [1], [0, 0, 1, 1], [], []>} : vector<16x128xbf16>, vector<128x128xbf16>, vector<16x128xf32> -> vector<16x128xf32>
    %148 = arith.addf %146, %147 : vector<16x128xf32>
    %c2_86 = arith.constant 2 : index
    %c1_87 = arith.constant 1 : index
    %c0_88 = arith.constant 0 : index
    %c0_89 = arith.constant 0 : index
    %149 = vector.load %arg3[%c2_86, %c1_87, %c0_88, %c0_89] : memref<8x4x16x128xbf16, #tpu.memory_space<vmem>>, vector<1x1x16x128xbf16>
    %150 = vector.shape_cast %149 : vector<1x1x16x128xbf16> to vector<16x128xbf16>
    %151 = arith.extf %150 : vector<16x128xbf16> to vector<16x128xf32>
    %cst_90 = arith.constant dense<0.000000e+00> : vector<16x128xf32>
    %152 = tpu.matmul %143, %9, %cst_90 {dimension_numbers = #tpu.dot_dimension_numbers<[1], [0], [0], [1], [0, 0, 1, 1], [], []>} : vector<16x128xbf16>, vector<128x128xbf16>, vector<16x128xf32> -> vector<16x128xf32>
    %153 = arith.addf %151, %152 : vector<16x128xf32>
    %c2_91 = arith.constant 2 : index
    %c2_92 = arith.constant 2 : index
    %c0_93 = arith.constant 0 : index
    %c0_94 = arith.constant 0 : index
    %154 = vector.load %arg3[%c2_91, %c2_92, %c0_93, %c0_94] : memref<8x4x16x128xbf16, #tpu.memory_space<vmem>>, vector<1x1x16x128xbf16>
    %155 = vector.shape_cast %154 : vector<1x1x16x128xbf16> to vector<16x128xbf16>
    %156 = arith.extf %155 : vector<16x128xbf16> to vector<16x128xf32>
    %cst_95 = arith.constant dense<0.000000e+00> : vector<16x128xf32>
    %157 = tpu.matmul %143, %11, %cst_95 {dimension_numbers = #tpu.dot_dimension_numbers<[1], [0], [0], [1], [0, 0, 1, 1], [], []>} : vector<16x128xbf16>, vector<128x128xbf16>, vector<16x128xf32> -> vector<16x128xf32>
    %158 = arith.addf %156, %157 : vector<16x128xf32>
    %c2_96 = arith.constant 2 : index
    %c3_97 = arith.constant 3 : index
    %c0_98 = arith.constant 0 : index
    %c0_99 = arith.constant 0 : index
    %159 = vector.load %arg3[%c2_96, %c3_97, %c0_98, %c0_99] : memref<8x4x16x128xbf16, #tpu.memory_space<vmem>>, vector<1x1x16x128xbf16>
    %160 = vector.shape_cast %159 : vector<1x1x16x128xbf16> to vector<16x128xbf16>
    %161 = arith.extf %160 : vector<16x128xbf16> to vector<16x128xf32>
    %cst_100 = arith.constant dense<0.000000e+00> : vector<16x128xf32>
    %162 = tpu.matmul %143, %13, %cst_100 {dimension_numbers = #tpu.dot_dimension_numbers<[1], [0], [0], [1], [0, 0, 1, 1], [], []>} : vector<16x128xbf16>, vector<128x128xbf16>, vector<16x128xf32> -> vector<16x128xf32>
    %163 = arith.addf %161, %162 : vector<16x128xf32>
    %cst_101 = arith.constant 5.000000e-01 : f32
    %164 = vector.broadcast %cst_101 : f32 to vector<16x128xf32>
    %165 = arith.mulf %164, %148 : vector<16x128xf32>
    %166 = math.tanh %165 : vector<16x128xf32>
    %cst_102 = arith.constant 5.000000e-01 : f32
    %167 = vector.broadcast %cst_102 : f32 to vector<16x128xf32>
    %168 = arith.mulf %167, %166 : vector<16x128xf32>
    %cst_103 = arith.constant 5.000000e-01 : f32
    %169 = vector.broadcast %cst_103 : f32 to vector<16x128xf32>
    %170 = arith.addf %168, %169 : vector<16x128xf32>
    %cst_104 = arith.constant 5.000000e-01 : f32
    %171 = vector.broadcast %cst_104 : f32 to vector<16x128xf32>
    %172 = arith.mulf %171, %153 : vector<16x128xf32>
    %173 = math.tanh %172 : vector<16x128xf32>
    %cst_105 = arith.constant 5.000000e-01 : f32
    %174 = vector.broadcast %cst_105 : f32 to vector<16x128xf32>
    %175 = arith.mulf %174, %173 : vector<16x128xf32>
    %cst_106 = arith.constant 5.000000e-01 : f32
    %176 = vector.broadcast %cst_106 : f32 to vector<16x128xf32>
    %177 = arith.addf %175, %176 : vector<16x128xf32>
    %178 = math.tanh %158 : vector<16x128xf32>
    %cst_107 = arith.constant 5.000000e-01 : f32
    %179 = vector.broadcast %cst_107 : f32 to vector<16x128xf32>
    %180 = arith.mulf %179, %163 : vector<16x128xf32>
    %181 = math.tanh %180 : vector<16x128xf32>
    %cst_108 = arith.constant 5.000000e-01 : f32
    %182 = vector.broadcast %cst_108 : f32 to vector<16x128xf32>
    %183 = arith.mulf %182, %181 : vector<16x128xf32>
    %cst_109 = arith.constant 5.000000e-01 : f32
    %184 = vector.broadcast %cst_109 : f32 to vector<16x128xf32>
    %185 = arith.addf %183, %184 : vector<16x128xf32>
    %186 = arith.mulf %177, %135 : vector<16x128xf32>
    %187 = arith.mulf %170, %178 : vector<16x128xf32>
    %188 = arith.addf %186, %187 : vector<16x128xf32>
    %189 = math.tanh %188 : vector<16x128xf32>
    %190 = arith.mulf %185, %189 : vector<16x128xf32>
    %c2_i32 = arith.constant 2 : i32
    %191 = arith.addi %14, %c2_i32 : i32
    %192 = vector.broadcast %191 : i32 to vector<16x1xi32>
    %193 = arith.cmpi sgt, %5, %192 : vector<16x1xi32>
    %194 = vector.shape_cast %193 : vector<16x1xi1> to vector<16x1xi1>
    %195 = vector.broadcast %194 : vector<16x1xi1> to vector<16x128xi1>
    %196 = arith.select %195, %190, %132 : vector<16x128xi1>, vector<16x128xf32>
    %197 = vector.shape_cast %193 : vector<16x1xi1> to vector<16x1xi1>
    %198 = vector.broadcast %197 : vector<16x1xi1> to vector<16x128xi1>
    %199 = arith.select %198, %188, %135 : vector<16x128xi1>, vector<16x128xf32>
    %cst_110 = arith.constant 0.000000e+00 : f32
    %200 = vector.shape_cast %193 : vector<16x1xi1> to vector<16x1xi1>
    %201 = vector.broadcast %200 : vector<16x1xi1> to vector<16x128xi1>
    %202 = vector.broadcast %cst_110 : f32 to vector<16x128xf32>
    %203 = arith.select %201, %190, %202 : vector<16x128xi1>, vector<16x128xf32>
    %c0_111 = arith.constant 0 : index
    %c2_112 = arith.constant 2 : index
    %c0_113 = arith.constant 0 : index
    %204 = vector.load %arg5[%c0_111, %c2_112, %c0_113] : memref<16x8x128xf32, #tpu.memory_space<vmem>>, vector<16x1x128xf32>
    %205 = vector.shape_cast %204 : vector<16x1x128xf32> to vector<16x128xf32>
    %206 = vector.shape_cast %203 : vector<16x128xf32> to vector<16x1x128xf32>
    tpu.vector_store %arg5[%c0_111, %c2_112, %c0_113], %206 {strides = array<i32>} : memref<16x8x128xf32, #tpu.memory_space<vmem>>, vector<16x1x128xf32>,
    %207 = arith.truncf %196 : vector<16x128xf32> to vector<16x128xbf16>
    %c3_114 = arith.constant 3 : index
    %c0_115 = arith.constant 0 : index
    %c0_116 = arith.constant 0 : index
    %c0_117 = arith.constant 0 : index
    %208 = vector.load %arg3[%c3_114, %c0_115, %c0_116, %c0_117] : memref<8x4x16x128xbf16, #tpu.memory_space<vmem>>, vector<1x1x16x128xbf16>
    %209 = vector.shape_cast %208 : vector<1x1x16x128xbf16> to vector<16x128xbf16>
    %210 = arith.extf %209 : vector<16x128xbf16> to vector<16x128xf32>
    %cst_118 = arith.constant dense<0.000000e+00> : vector<16x128xf32>
    %211 = tpu.matmul %207, %7, %cst_118 {dimension_numbers = #tpu.dot_dimension_numbers<[1], [0], [0], [1], [0, 0, 1, 1], [], []>} : vector<16x128xbf16>, vector<128x128xbf16>, vector<16x128xf32> -> vector<16x128xf32>
    %212 = arith.addf %210, %211 : vector<16x128xf32>
    %c3_119 = arith.constant 3 : index
    %c1_120 = arith.constant 1 : index
    %c0_121 = arith.constant 0 : index
    %c0_122 = arith.constant 0 : index
    %213 = vector.load %arg3[%c3_119, %c1_120, %c0_121, %c0_122] : memref<8x4x16x128xbf16, #tpu.memory_space<vmem>>, vector<1x1x16x128xbf16>
    %214 = vector.shape_cast %213 : vector<1x1x16x128xbf16> to vector<16x128xbf16>
    %215 = arith.extf %214 : vector<16x128xbf16> to vector<16x128xf32>
    %cst_123 = arith.constant dense<0.000000e+00> : vector<16x128xf32>
    %216 = tpu.matmul %207, %9, %cst_123 {dimension_numbers = #tpu.dot_dimension_numbers<[1], [0], [0], [1], [0, 0, 1, 1], [], []>} : vector<16x128xbf16>, vector<128x128xbf16>, vector<16x128xf32> -> vector<16x128xf32>
    %217 = arith.addf %215, %216 : vector<16x128xf32>
    %c3_124 = arith.constant 3 : index
    %c2_125 = arith.constant 2 : index
    %c0_126 = arith.constant 0 : index
    %c0_127 = arith.constant 0 : index
    %218 = vector.load %arg3[%c3_124, %c2_125, %c0_126, %c0_127] : memref<8x4x16x128xbf16, #tpu.memory_space<vmem>>, vector<1x1x16x128xbf16>
    %219 = vector.shape_cast %218 : vector<1x1x16x128xbf16> to vector<16x128xbf16>
    %220 = arith.extf %219 : vector<16x128xbf16> to vector<16x128xf32>
    %cst_128 = arith.constant dense<0.000000e+00> : vector<16x128xf32>
    %221 = tpu.matmul %207, %11, %cst_128 {dimension_numbers = #tpu.dot_dimension_numbers<[1], [0], [0], [1], [0, 0, 1, 1], [], []>} : vector<16x128xbf16>, vector<128x128xbf16>, vector<16x128xf32> -> vector<16x128xf32>
    %222 = arith.addf %220, %221 : vector<16x128xf32>
    %c3_129 = arith.constant 3 : index
    %c3_130 = arith.constant 3 : index
    %c0_131 = arith.constant 0 : index
    %c0_132 = arith.constant 0 : index
    %223 = vector.load %arg3[%c3_129, %c3_130, %c0_131, %c0_132] : memref<8x4x16x128xbf16, #tpu.memory_space<vmem>>, vector<1x1x16x128xbf16>
    %224 = vector.shape_cast %223 : vector<1x1x16x128xbf16> to vector<16x128xbf16>
    %225 = arith.extf %224 : vector<16x128xbf16> to vector<16x128xf32>
    %cst_133 = arith.constant dense<0.000000e+00> : vector<16x128xf32>
    %226 = tpu.matmul %207, %13, %cst_133 {dimension_numbers = #tpu.dot_dimension_numbers<[1], [0], [0], [1], [0, 0, 1, 1], [], []>} : vector<16x128xbf16>, vector<128x128xbf16>, vector<16x128xf32> -> vector<16x128xf32>
    %227 = arith.addf %225, %226 : vector<16x128xf32>
    %cst_134 = arith.constant 5.000000e-01 : f32
    %228 = vector.broadcast %cst_134 : f32 to vector<16x128xf32>
    %229 = arith.mulf %228, %212 : vector<16x128xf32>
    %230 = math.tanh %229 : vector<16x128xf32>
    %cst_135 = arith.constant 5.000000e-01 : f32
    %231 = vector.broadcast %cst_135 : f32 to vector<16x128xf32>
    %232 = arith.mulf %231, %230 : vector<16x128xf32>
    %cst_136 = arith.constant 5.000000e-01 : f32
    %233 = vector.broadcast %cst_136 : f32 to vector<16x128xf32>
    %234 = arith.addf %232, %233 : vector<16x128xf32>
    %cst_137 = arith.constant 5.000000e-01 : f32
    %235 = vector.broadcast %cst_137 : f32 to vector<16x128xf32>
    %236 = arith.mulf %235, %217 : vector<16x128xf32>
    %237 = math.tanh %236 : vector<16x128xf32>
    %cst_138 = arith.constant 5.000000e-01 : f32
    %238 = vector.broadcast %cst_138 : f32 to vector<16x128xf32>
    %239 = arith.mulf %238, %237 : vector<16x128xf32>
    %cst_139 = arith.constant 5.000000e-01 : f32
    %240 = vector.broadcast %cst_139 : f32 to vector<16x128xf32>
    %241 = arith.addf %239, %240 : vector<16x128xf32>
    %242 = math.tanh %222 : vector<16x128xf32>
    %cst_140 = arith.constant 5.000000e-01 : f32
    %243 = vector.broadcast %cst_140 : f32 to vector<16x128xf32>
    %244 = arith.mulf %243, %227 : vector<16x128xf32>
    %245 = math.tanh %244 : vector<16x128xf32>
    %cst_141 = arith.constant 5.000000e-01 : f32
    %246 = vector.broadcast %cst_141 : f32 to vector<16x128xf32>
    %247 = arith.mulf %246, %245 : vector<16x128xf32>
    %cst_142 = arith.constant 5.000000e-01 : f32
    %248 = vector.broadcast %cst_142 : f32 to vector<16x128xf32>
    %249 = arith.addf %247, %248 : vector<16x128xf32>
    %250 = arith.mulf %241, %199 : vector<16x128xf32>
    %251 = arith.mulf %234, %242 : vector<16x128xf32>
    %252 = arith.addf %250, %251 : vector<16x128xf32>
    %253 = math.tanh %252 : vector<16x128xf32>
    %254 = arith.mulf %249, %253 : vector<16x128xf32>
    %c3_i32 = arith.constant 3 : i32
    %255 = arith.addi %14, %c3_i32 : i32
    %256 = vector.broadcast %255 : i32 to vector<16x1xi32>
    %257 = arith.cmpi sgt, %5, %256 : vector<16x1xi32>
    %258 = vector.shape_cast %257 : vector<16x1xi1> to vector<16x1xi1>
    %259 = vector.broadcast %258 : vector<16x1xi1> to vector<16x128xi1>
    %260 = arith.select %259, %254, %196 : vector<16x128xi1>, vector<16x128xf32>
    %261 = vector.shape_cast %257 : vector<16x1xi1> to vector<16x1xi1>
    %262 = vector.broadcast %261 : vector<16x1xi1> to vector<16x128xi1>
    %263 = arith.select %262, %252, %199 : vector<16x128xi1>, vector<16x128xf32>
    %cst_143 = arith.constant 0.000000e+00 : f32
    %264 = vector.shape_cast %257 : vector<16x1xi1> to vector<16x1xi1>
    %265 = vector.broadcast %264 : vector<16x1xi1> to vector<16x128xi1>
    %266 = vector.broadcast %cst_143 : f32 to vector<16x128xf32>
    %267 = arith.select %265, %254, %266 : vector<16x128xi1>, vector<16x128xf32>
    %c0_144 = arith.constant 0 : index
    %c3_145 = arith.constant 3 : index
    %c0_146 = arith.constant 0 : index
    %268 = vector.load %arg5[%c0_144, %c3_145, %c0_146] : memref<16x8x128xf32, #tpu.memory_space<vmem>>, vector<16x1x128xf32>
    %269 = vector.shape_cast %268 : vector<16x1x128xf32> to vector<16x128xf32>
    %270 = vector.shape_cast %267 : vector<16x128xf32> to vector<16x1x128xf32>
    tpu.vector_store %arg5[%c0_144, %c3_145, %c0_146], %270 {strides = array<i32>} : memref<16x8x128xf32, #tpu.memory_space<vmem>>, vector<16x1x128xf32>,
    %271 = arith.truncf %260 : vector<16x128xf32> to vector<16x128xbf16>
    %c4 = arith.constant 4 : index
    %c0_147 = arith.constant 0 : index
    %c0_148 = arith.constant 0 : index
    %c0_149 = arith.constant 0 : index
    %272 = vector.load %arg3[%c4, %c0_147, %c0_148, %c0_149] : memref<8x4x16x128xbf16, #tpu.memory_space<vmem>>, vector<1x1x16x128xbf16>
    %273 = vector.shape_cast %272 : vector<1x1x16x128xbf16> to vector<16x128xbf16>
    %274 = arith.extf %273 : vector<16x128xbf16> to vector<16x128xf32>
    %cst_150 = arith.constant dense<0.000000e+00> : vector<16x128xf32>
    %275 = tpu.matmul %271, %7, %cst_150 {dimension_numbers = #tpu.dot_dimension_numbers<[1], [0], [0], [1], [0, 0, 1, 1], [], []>} : vector<16x128xbf16>, vector<128x128xbf16>, vector<16x128xf32> -> vector<16x128xf32>
    %276 = arith.addf %274, %275 : vector<16x128xf32>
    %c4_151 = arith.constant 4 : index
    %c1_152 = arith.constant 1 : index
    %c0_153 = arith.constant 0 : index
    %c0_154 = arith.constant 0 : index
    %277 = vector.load %arg3[%c4_151, %c1_152, %c0_153, %c0_154] : memref<8x4x16x128xbf16, #tpu.memory_space<vmem>>, vector<1x1x16x128xbf16>
    %278 = vector.shape_cast %277 : vector<1x1x16x128xbf16> to vector<16x128xbf16>
    %279 = arith.extf %278 : vector<16x128xbf16> to vector<16x128xf32>
    %cst_155 = arith.constant dense<0.000000e+00> : vector<16x128xf32>
    %280 = tpu.matmul %271, %9, %cst_155 {dimension_numbers = #tpu.dot_dimension_numbers<[1], [0], [0], [1], [0, 0, 1, 1], [], []>} : vector<16x128xbf16>, vector<128x128xbf16>, vector<16x128xf32> -> vector<16x128xf32>
    %281 = arith.addf %279, %280 : vector<16x128xf32>
    %c4_156 = arith.constant 4 : index
    %c2_157 = arith.constant 2 : index
    %c0_158 = arith.constant 0 : index
    %c0_159 = arith.constant 0 : index
    %282 = vector.load %arg3[%c4_156, %c2_157, %c0_158, %c0_159] : memref<8x4x16x128xbf16, #tpu.memory_space<vmem>>, vector<1x1x16x128xbf16>
    %283 = vector.shape_cast %282 : vector<1x1x16x128xbf16> to vector<16x128xbf16>
    %284 = arith.extf %283 : vector<16x128xbf16> to vector<16x128xf32>
    %cst_160 = arith.constant dense<0.000000e+00> : vector<16x128xf32>
    %285 = tpu.matmul %271, %11, %cst_160 {dimension_numbers = #tpu.dot_dimension_numbers<[1], [0], [0], [1], [0, 0, 1, 1], [], []>} : vector<16x128xbf16>, vector<128x128xbf16>, vector<16x128xf32> -> vector<16x128xf32>
    %286 = arith.addf %284, %285 : vector<16x128xf32>
    %c4_161 = arith.constant 4 : index
    %c3_162 = arith.constant 3 : index
    %c0_163 = arith.constant 0 : index
    %c0_164 = arith.constant 0 : index
    %287 = vector.load %arg3[%c4_161, %c3_162, %c0_163, %c0_164] : memref<8x4x16x128xbf16, #tpu.memory_space<vmem>>, vector<1x1x16x128xbf16>
    %288 = vector.shape_cast %287 : vector<1x1x16x128xbf16> to vector<16x128xbf16>
    %289 = arith.extf %288 : vector<16x128xbf16> to vector<16x128xf32>
    %cst_165 = arith.constant dense<0.000000e+00> : vector<16x128xf32>
    %290 = tpu.matmul %271, %13, %cst_165 {dimension_numbers = #tpu.dot_dimension_numbers<[1], [0], [0], [1], [0, 0, 1, 1], [], []>} : vector<16x128xbf16>, vector<128x128xbf16>, vector<16x128xf32> -> vector<16x128xf32>
    %291 = arith.addf %289, %290 : vector<16x128xf32>
    %cst_166 = arith.constant 5.000000e-01 : f32
    %292 = vector.broadcast %cst_166 : f32 to vector<16x128xf32>
    %293 = arith.mulf %292, %276 : vector<16x128xf32>
    %294 = math.tanh %293 : vector<16x128xf32>
    %cst_167 = arith.constant 5.000000e-01 : f32
    %295 = vector.broadcast %cst_167 : f32 to vector<16x128xf32>
    %296 = arith.mulf %295, %294 : vector<16x128xf32>
    %cst_168 = arith.constant 5.000000e-01 : f32
    %297 = vector.broadcast %cst_168 : f32 to vector<16x128xf32>
    %298 = arith.addf %296, %297 : vector<16x128xf32>
    %cst_169 = arith.constant 5.000000e-01 : f32
    %299 = vector.broadcast %cst_169 : f32 to vector<16x128xf32>
    %300 = arith.mulf %299, %281 : vector<16x128xf32>
    %301 = math.tanh %300 : vector<16x128xf32>
    %cst_170 = arith.constant 5.000000e-01 : f32
    %302 = vector.broadcast %cst_170 : f32 to vector<16x128xf32>
    %303 = arith.mulf %302, %301 : vector<16x128xf32>
    %cst_171 = arith.constant 5.000000e-01 : f32
    %304 = vector.broadcast %cst_171 : f32 to vector<16x128xf32>
    %305 = arith.addf %303, %304 : vector<16x128xf32>
    %306 = math.tanh %286 : vector<16x128xf32>
    %cst_172 = arith.constant 5.000000e-01 : f32
    %307 = vector.broadcast %cst_172 : f32 to vector<16x128xf32>
    %308 = arith.mulf %307, %291 : vector<16x128xf32>
    %309 = math.tanh %308 : vector<16x128xf32>
    %cst_173 = arith.constant 5.000000e-01 : f32
    %310 = vector.broadcast %cst_173 : f32 to vector<16x128xf32>
    %311 = arith.mulf %310, %309 : vector<16x128xf32>
    %cst_174 = arith.constant 5.000000e-01 : f32
    %312 = vector.broadcast %cst_174 : f32 to vector<16x128xf32>
    %313 = arith.addf %311, %312 : vector<16x128xf32>
    %314 = arith.mulf %305, %263 : vector<16x128xf32>
    %315 = arith.mulf %298, %306 : vector<16x128xf32>
    %316 = arith.addf %314, %315 : vector<16x128xf32>
    %317 = math.tanh %316 : vector<16x128xf32>
    %318 = arith.mulf %313, %317 : vector<16x128xf32>
    %c4_i32 = arith.constant 4 : i32
    %319 = arith.addi %14, %c4_i32 : i32
    %320 = vector.broadcast %319 : i32 to vector<16x1xi32>
    %321 = arith.cmpi sgt, %5, %320 : vector<16x1xi32>
    %322 = vector.shape_cast %321 : vector<16x1xi1> to vector<16x1xi1>
    %323 = vector.broadcast %322 : vector<16x1xi1> to vector<16x128xi1>
    %324 = arith.select %323, %318, %260 : vector<16x128xi1>, vector<16x128xf32>
    %325 = vector.shape_cast %321 : vector<16x1xi1> to vector<16x1xi1>
    %326 = vector.broadcast %325 : vector<16x1xi1> to vector<16x128xi1>
    %327 = arith.select %326, %316, %263 : vector<16x128xi1>, vector<16x128xf32>
    %cst_175 = arith.constant 0.000000e+00 : f32
    %328 = vector.shape_cast %321 : vector<16x1xi1> to vector<16x1xi1>
    %329 = vector.broadcast %328 : vector<16x1xi1> to vector<16x128xi1>
    %330 = vector.broadcast %cst_175 : f32 to vector<16x128xf32>
    %331 = arith.select %329, %318, %330 : vector<16x128xi1>, vector<16x128xf32>
    %c0_176 = arith.constant 0 : index
    %c4_177 = arith.constant 4 : index
    %c0_178 = arith.constant 0 : index
    %332 = vector.load %arg5[%c0_176, %c4_177, %c0_178] : memref<16x8x128xf32, #tpu.memory_space<vmem>>, vector<16x1x128xf32>
    %333 = vector.shape_cast %332 : vector<16x1x128xf32> to vector<16x128xf32>
    %334 = vector.shape_cast %331 : vector<16x128xf32> to vector<16x1x128xf32>
    tpu.vector_store %arg5[%c0_176, %c4_177, %c0_178], %334 {strides = array<i32>} : memref<16x8x128xf32, #tpu.memory_space<vmem>>, vector<16x1x128xf32>,
    %335 = arith.truncf %324 : vector<16x128xf32> to vector<16x128xbf16>
    %c5 = arith.constant 5 : index
    %c0_179 = arith.constant 0 : index
    %c0_180 = arith.constant 0 : index
    %c0_181 = arith.constant 0 : index
    %336 = vector.load %arg3[%c5, %c0_179, %c0_180, %c0_181] : memref<8x4x16x128xbf16, #tpu.memory_space<vmem>>, vector<1x1x16x128xbf16>
    %337 = vector.shape_cast %336 : vector<1x1x16x128xbf16> to vector<16x128xbf16>
    %338 = arith.extf %337 : vector<16x128xbf16> to vector<16x128xf32>
    %cst_182 = arith.constant dense<0.000000e+00> : vector<16x128xf32>
    %339 = tpu.matmul %335, %7, %cst_182 {dimension_numbers = #tpu.dot_dimension_numbers<[1], [0], [0], [1], [0, 0, 1, 1], [], []>} : vector<16x128xbf16>, vector<128x128xbf16>, vector<16x128xf32> -> vector<16x128xf32>
    %340 = arith.addf %338, %339 : vector<16x128xf32>
    %c5_183 = arith.constant 5 : index
    %c1_184 = arith.constant 1 : index
    %c0_185 = arith.constant 0 : index
    %c0_186 = arith.constant 0 : index
    %341 = vector.load %arg3[%c5_183, %c1_184, %c0_185, %c0_186] : memref<8x4x16x128xbf16, #tpu.memory_space<vmem>>, vector<1x1x16x128xbf16>
    %342 = vector.shape_cast %341 : vector<1x1x16x128xbf16> to vector<16x128xbf16>
    %343 = arith.extf %342 : vector<16x128xbf16> to vector<16x128xf32>
    %cst_187 = arith.constant dense<0.000000e+00> : vector<16x128xf32>
    %344 = tpu.matmul %335, %9, %cst_187 {dimension_numbers = #tpu.dot_dimension_numbers<[1], [0], [0], [1], [0, 0, 1, 1], [], []>} : vector<16x128xbf16>, vector<128x128xbf16>, vector<16x128xf32> -> vector<16x128xf32>
    %345 = arith.addf %343, %344 : vector<16x128xf32>
    %c5_188 = arith.constant 5 : index
    %c2_189 = arith.constant 2 : index
    %c0_190 = arith.constant 0 : index
    %c0_191 = arith.constant 0 : index
    %346 = vector.load %arg3[%c5_188, %c2_189, %c0_190, %c0_191] : memref<8x4x16x128xbf16, #tpu.memory_space<vmem>>, vector<1x1x16x128xbf16>
    %347 = vector.shape_cast %346 : vector<1x1x16x128xbf16> to vector<16x128xbf16>
    %348 = arith.extf %347 : vector<16x128xbf16> to vector<16x128xf32>
    %cst_192 = arith.constant dense<0.000000e+00> : vector<16x128xf32>
    %349 = tpu.matmul %335, %11, %cst_192 {dimension_numbers = #tpu.dot_dimension_numbers<[1], [0], [0], [1], [0, 0, 1, 1], [], []>} : vector<16x128xbf16>, vector<128x128xbf16>, vector<16x128xf32> -> vector<16x128xf32>
    %350 = arith.addf %348, %349 : vector<16x128xf32>
    %c5_193 = arith.constant 5 : index
    %c3_194 = arith.constant 3 : index
    %c0_195 = arith.constant 0 : index
    %c0_196 = arith.constant 0 : index
    %351 = vector.load %arg3[%c5_193, %c3_194, %c0_195, %c0_196] : memref<8x4x16x128xbf16, #tpu.memory_space<vmem>>, vector<1x1x16x128xbf16>
    %352 = vector.shape_cast %351 : vector<1x1x16x128xbf16> to vector<16x128xbf16>
    %353 = arith.extf %352 : vector<16x128xbf16> to vector<16x128xf32>
    %cst_197 = arith.constant dense<0.000000e+00> : vector<16x128xf32>
    %354 = tpu.matmul %335, %13, %cst_197 {dimension_numbers = #tpu.dot_dimension_numbers<[1], [0], [0], [1], [0, 0, 1, 1], [], []>} : vector<16x128xbf16>, vector<128x128xbf16>, vector<16x128xf32> -> vector<16x128xf32>
    %355 = arith.addf %353, %354 : vector<16x128xf32>
    %cst_198 = arith.constant 5.000000e-01 : f32
    %356 = vector.broadcast %cst_198 : f32 to vector<16x128xf32>
    %357 = arith.mulf %356, %340 : vector<16x128xf32>
    %358 = math.tanh %357 : vector<16x128xf32>
    %cst_199 = arith.constant 5.000000e-01 : f32
    %359 = vector.broadcast %cst_199 : f32 to vector<16x128xf32>
    %360 = arith.mulf %359, %358 : vector<16x128xf32>
    %cst_200 = arith.constant 5.000000e-01 : f32
    %361 = vector.broadcast %cst_200 : f32 to vector<16x128xf32>
    %362 = arith.addf %360, %361 : vector<16x128xf32>
    %cst_201 = arith.constant 5.000000e-01 : f32
    %363 = vector.broadcast %cst_201 : f32 to vector<16x128xf32>
    %364 = arith.mulf %363, %345 : vector<16x128xf32>
    %365 = math.tanh %364 : vector<16x128xf32>
    %cst_202 = arith.constant 5.000000e-01 : f32
    %366 = vector.broadcast %cst_202 : f32 to vector<16x128xf32>
    %367 = arith.mulf %366, %365 : vector<16x128xf32>
    %cst_203 = arith.constant 5.000000e-01 : f32
    %368 = vector.broadcast %cst_203 : f32 to vector<16x128xf32>
    %369 = arith.addf %367, %368 : vector<16x128xf32>
    %370 = math.tanh %350 : vector<16x128xf32>
    %cst_204 = arith.constant 5.000000e-01 : f32
    %371 = vector.broadcast %cst_204 : f32 to vector<16x128xf32>
    %372 = arith.mulf %371, %355 : vector<16x128xf32>
    %373 = math.tanh %372 : vector<16x128xf32>
    %cst_205 = arith.constant 5.000000e-01 : f32
    %374 = vector.broadcast %cst_205 : f32 to vector<16x128xf32>
    %375 = arith.mulf %374, %373 : vector<16x128xf32>
    %cst_206 = arith.constant 5.000000e-01 : f32
    %376 = vector.broadcast %cst_206 : f32 to vector<16x128xf32>
    %377 = arith.addf %375, %376 : vector<16x128xf32>
    %378 = arith.mulf %369, %327 : vector<16x128xf32>
    %379 = arith.mulf %362, %370 : vector<16x128xf32>
    %380 = arith.addf %378, %379 : vector<16x128xf32>
    %381 = math.tanh %380 : vector<16x128xf32>
    %382 = arith.mulf %377, %381 : vector<16x128xf32>
    %c5_i32 = arith.constant 5 : i32
    %383 = arith.addi %14, %c5_i32 : i32
    %384 = vector.broadcast %383 : i32 to vector<16x1xi32>
    %385 = arith.cmpi sgt, %5, %384 : vector<16x1xi32>
    %386 = vector.shape_cast %385 : vector<16x1xi1> to vector<16x1xi1>
    %387 = vector.broadcast %386 : vector<16x1xi1> to vector<16x128xi1>
    %388 = arith.select %387, %382, %324 : vector<16x128xi1>, vector<16x128xf32>
    %389 = vector.shape_cast %385 : vector<16x1xi1> to vector<16x1xi1>
    %390 = vector.broadcast %389 : vector<16x1xi1> to vector<16x128xi1>
    %391 = arith.select %390, %380, %327 : vector<16x128xi1>, vector<16x128xf32>
    %cst_207 = arith.constant 0.000000e+00 : f32
    %392 = vector.shape_cast %385 : vector<16x1xi1> to vector<16x1xi1>
    %393 = vector.broadcast %392 : vector<16x1xi1> to vector<16x128xi1>
    %394 = vector.broadcast %cst_207 : f32 to vector<16x128xf32>
    %395 = arith.select %393, %382, %394 : vector<16x128xi1>, vector<16x128xf32>
    %c0_208 = arith.constant 0 : index
    %c5_209 = arith.constant 5 : index
    %c0_210 = arith.constant 0 : index
    %396 = vector.load %arg5[%c0_208, %c5_209, %c0_210] : memref<16x8x128xf32, #tpu.memory_space<vmem>>, vector<16x1x128xf32>
    %397 = vector.shape_cast %396 : vector<16x1x128xf32> to vector<16x128xf32>
    %398 = vector.shape_cast %395 : vector<16x128xf32> to vector<16x1x128xf32>
    tpu.vector_store %arg5[%c0_208, %c5_209, %c0_210], %398 {strides = array<i32>} : memref<16x8x128xf32, #tpu.memory_space<vmem>>, vector<16x1x128xf32>,
    %399 = arith.truncf %388 : vector<16x128xf32> to vector<16x128xbf16>
    %c6 = arith.constant 6 : index
    %c0_211 = arith.constant 0 : index
    %c0_212 = arith.constant 0 : index
    %c0_213 = arith.constant 0 : index
    %400 = vector.load %arg3[%c6, %c0_211, %c0_212, %c0_213] : memref<8x4x16x128xbf16, #tpu.memory_space<vmem>>, vector<1x1x16x128xbf16>
    %401 = vector.shape_cast %400 : vector<1x1x16x128xbf16> to vector<16x128xbf16>
    %402 = arith.extf %401 : vector<16x128xbf16> to vector<16x128xf32>
    %cst_214 = arith.constant dense<0.000000e+00> : vector<16x128xf32>
    %403 = tpu.matmul %399, %7, %cst_214 {dimension_numbers = #tpu.dot_dimension_numbers<[1], [0], [0], [1], [0, 0, 1, 1], [], []>} : vector<16x128xbf16>, vector<128x128xbf16>, vector<16x128xf32> -> vector<16x128xf32>
    %404 = arith.addf %402, %403 : vector<16x128xf32>
    %c6_215 = arith.constant 6 : index
    %c1_216 = arith.constant 1 : index
    %c0_217 = arith.constant 0 : index
    %c0_218 = arith.constant 0 : index
    %405 = vector.load %arg3[%c6_215, %c1_216, %c0_217, %c0_218] : memref<8x4x16x128xbf16, #tpu.memory_space<vmem>>, vector<1x1x16x128xbf16>
    %406 = vector.shape_cast %405 : vector<1x1x16x128xbf16> to vector<16x128xbf16>
    %407 = arith.extf %406 : vector<16x128xbf16> to vector<16x128xf32>
    %cst_219 = arith.constant dense<0.000000e+00> : vector<16x128xf32>
    %408 = tpu.matmul %399, %9, %cst_219 {dimension_numbers = #tpu.dot_dimension_numbers<[1], [0], [0], [1], [0, 0, 1, 1], [], []>} : vector<16x128xbf16>, vector<128x128xbf16>, vector<16x128xf32> -> vector<16x128xf32>
    %409 = arith.addf %407, %408 : vector<16x128xf32>
    %c6_220 = arith.constant 6 : index
    %c2_221 = arith.constant 2 : index
    %c0_222 = arith.constant 0 : index
    %c0_223 = arith.constant 0 : index
    %410 = vector.load %arg3[%c6_220, %c2_221, %c0_222, %c0_223] : memref<8x4x16x128xbf16, #tpu.memory_space<vmem>>, vector<1x1x16x128xbf16>
    %411 = vector.shape_cast %410 : vector<1x1x16x128xbf16> to vector<16x128xbf16>
    %412 = arith.extf %411 : vector<16x128xbf16> to vector<16x128xf32>
    %cst_224 = arith.constant dense<0.000000e+00> : vector<16x128xf32>
    %413 = tpu.matmul %399, %11, %cst_224 {dimension_numbers = #tpu.dot_dimension_numbers<[1], [0], [0], [1], [0, 0, 1, 1], [], []>} : vector<16x128xbf16>, vector<128x128xbf16>, vector<16x128xf32> -> vector<16x128xf32>
    %414 = arith.addf %412, %413 : vector<16x128xf32>
    %c6_225 = arith.constant 6 : index
    %c3_226 = arith.constant 3 : index
    %c0_227 = arith.constant 0 : index
    %c0_228 = arith.constant 0 : index
    %415 = vector.load %arg3[%c6_225, %c3_226, %c0_227, %c0_228] : memref<8x4x16x128xbf16, #tpu.memory_space<vmem>>, vector<1x1x16x128xbf16>
    %416 = vector.shape_cast %415 : vector<1x1x16x128xbf16> to vector<16x128xbf16>
    %417 = arith.extf %416 : vector<16x128xbf16> to vector<16x128xf32>
    %cst_229 = arith.constant dense<0.000000e+00> : vector<16x128xf32>
    %418 = tpu.matmul %399, %13, %cst_229 {dimension_numbers = #tpu.dot_dimension_numbers<[1], [0], [0], [1], [0, 0, 1, 1], [], []>} : vector<16x128xbf16>, vector<128x128xbf16>, vector<16x128xf32> -> vector<16x128xf32>
    %419 = arith.addf %417, %418 : vector<16x128xf32>
    %cst_230 = arith.constant 5.000000e-01 : f32
    %420 = vector.broadcast %cst_230 : f32 to vector<16x128xf32>
    %421 = arith.mulf %420, %404 : vector<16x128xf32>
    %422 = math.tanh %421 : vector<16x128xf32>
    %cst_231 = arith.constant 5.000000e-01 : f32
    %423 = vector.broadcast %cst_231 : f32 to vector<16x128xf32>
    %424 = arith.mulf %423, %422 : vector<16x128xf32>
    %cst_232 = arith.constant 5.000000e-01 : f32
    %425 = vector.broadcast %cst_232 : f32 to vector<16x128xf32>
    %426 = arith.addf %424, %425 : vector<16x128xf32>
    %cst_233 = arith.constant 5.000000e-01 : f32
    %427 = vector.broadcast %cst_233 : f32 to vector<16x128xf32>
    %428 = arith.mulf %427, %409 : vector<16x128xf32>
    %429 = math.tanh %428 : vector<16x128xf32>
    %cst_234 = arith.constant 5.000000e-01 : f32
    %430 = vector.broadcast %cst_234 : f32 to vector<16x128xf32>
    %431 = arith.mulf %430, %429 : vector<16x128xf32>
    %cst_235 = arith.constant 5.000000e-01 : f32
    %432 = vector.broadcast %cst_235 : f32 to vector<16x128xf32>
    %433 = arith.addf %431, %432 : vector<16x128xf32>
    %434 = math.tanh %414 : vector<16x128xf32>
    %cst_236 = arith.constant 5.000000e-01 : f32
    %435 = vector.broadcast %cst_236 : f32 to vector<16x128xf32>
    %436 = arith.mulf %435, %419 : vector<16x128xf32>
    %437 = math.tanh %436 : vector<16x128xf32>
    %cst_237 = arith.constant 5.000000e-01 : f32
    %438 = vector.broadcast %cst_237 : f32 to vector<16x128xf32>
    %439 = arith.mulf %438, %437 : vector<16x128xf32>
    %cst_238 = arith.constant 5.000000e-01 : f32
    %440 = vector.broadcast %cst_238 : f32 to vector<16x128xf32>
    %441 = arith.addf %439, %440 : vector<16x128xf32>
    %442 = arith.mulf %433, %391 : vector<16x128xf32>
    %443 = arith.mulf %426, %434 : vector<16x128xf32>
    %444 = arith.addf %442, %443 : vector<16x128xf32>
    %445 = math.tanh %444 : vector<16x128xf32>
    %446 = arith.mulf %441, %445 : vector<16x128xf32>
    %c6_i32 = arith.constant 6 : i32
    %447 = arith.addi %14, %c6_i32 : i32
    %448 = vector.broadcast %447 : i32 to vector<16x1xi32>
    %449 = arith.cmpi sgt, %5, %448 : vector<16x1xi32>
    %450 = vector.shape_cast %449 : vector<16x1xi1> to vector<16x1xi1>
    %451 = vector.broadcast %450 : vector<16x1xi1> to vector<16x128xi1>
    %452 = arith.select %451, %446, %388 : vector<16x128xi1>, vector<16x128xf32>
    %453 = vector.shape_cast %449 : vector<16x1xi1> to vector<16x1xi1>
    %454 = vector.broadcast %453 : vector<16x1xi1> to vector<16x128xi1>
    %455 = arith.select %454, %444, %391 : vector<16x128xi1>, vector<16x128xf32>
    %cst_239 = arith.constant 0.000000e+00 : f32
    %456 = vector.shape_cast %449 : vector<16x1xi1> to vector<16x1xi1>
    %457 = vector.broadcast %456 : vector<16x1xi1> to vector<16x128xi1>
    %458 = vector.broadcast %cst_239 : f32 to vector<16x128xf32>
    %459 = arith.select %457, %446, %458 : vector<16x128xi1>, vector<16x128xf32>
    %c0_240 = arith.constant 0 : index
    %c6_241 = arith.constant 6 : index
    %c0_242 = arith.constant 0 : index
    %460 = vector.load %arg5[%c0_240, %c6_241, %c0_242] : memref<16x8x128xf32, #tpu.memory_space<vmem>>, vector<16x1x128xf32>
    %461 = vector.shape_cast %460 : vector<16x1x128xf32> to vector<16x128xf32>
    %462 = vector.shape_cast %459 : vector<16x128xf32> to vector<16x1x128xf32>
    tpu.vector_store %arg5[%c0_240, %c6_241, %c0_242], %462 {strides = array<i32>} : memref<16x8x128xf32, #tpu.memory_space<vmem>>, vector<16x1x128xf32>,
    %463 = arith.truncf %452 : vector<16x128xf32> to vector<16x128xbf16>
    %c7 = arith.constant 7 : index
    %c0_243 = arith.constant 0 : index
    %c0_244 = arith.constant 0 : index
    %c0_245 = arith.constant 0 : index
    %464 = vector.load %arg3[%c7, %c0_243, %c0_244, %c0_245] : memref<8x4x16x128xbf16, #tpu.memory_space<vmem>>, vector<1x1x16x128xbf16>
    %465 = vector.shape_cast %464 : vector<1x1x16x128xbf16> to vector<16x128xbf16>
    %466 = arith.extf %465 : vector<16x128xbf16> to vector<16x128xf32>
    %cst_246 = arith.constant dense<0.000000e+00> : vector<16x128xf32>
    %467 = tpu.matmul %463, %7, %cst_246 {dimension_numbers = #tpu.dot_dimension_numbers<[1], [0], [0], [1], [0, 0, 1, 1], [], []>} : vector<16x128xbf16>, vector<128x128xbf16>, vector<16x128xf32> -> vector<16x128xf32>
    %468 = arith.addf %466, %467 : vector<16x128xf32>
    %c7_247 = arith.constant 7 : index
    %c1_248 = arith.constant 1 : index
    %c0_249 = arith.constant 0 : index
    %c0_250 = arith.constant 0 : index
    %469 = vector.load %arg3[%c7_247, %c1_248, %c0_249, %c0_250] : memref<8x4x16x128xbf16, #tpu.memory_space<vmem>>, vector<1x1x16x128xbf16>
    %470 = vector.shape_cast %469 : vector<1x1x16x128xbf16> to vector<16x128xbf16>
    %471 = arith.extf %470 : vector<16x128xbf16> to vector<16x128xf32>
    %cst_251 = arith.constant dense<0.000000e+00> : vector<16x128xf32>
    %472 = tpu.matmul %463, %9, %cst_251 {dimension_numbers = #tpu.dot_dimension_numbers<[1], [0], [0], [1], [0, 0, 1, 1], [], []>} : vector<16x128xbf16>, vector<128x128xbf16>, vector<16x128xf32> -> vector<16x128xf32>
    %473 = arith.addf %471, %472 : vector<16x128xf32>
    %c7_252 = arith.constant 7 : index
    %c2_253 = arith.constant 2 : index
    %c0_254 = arith.constant 0 : index
    %c0_255 = arith.constant 0 : index
    %474 = vector.load %arg3[%c7_252, %c2_253, %c0_254, %c0_255] : memref<8x4x16x128xbf16, #tpu.memory_space<vmem>>, vector<1x1x16x128xbf16>
    %475 = vector.shape_cast %474 : vector<1x1x16x128xbf16> to vector<16x128xbf16>
    %476 = arith.extf %475 : vector<16x128xbf16> to vector<16x128xf32>
    %cst_256 = arith.constant dense<0.000000e+00> : vector<16x128xf32>
    %477 = tpu.matmul %463, %11, %cst_256 {dimension_numbers = #tpu.dot_dimension_numbers<[1], [0], [0], [1], [0, 0, 1, 1], [], []>} : vector<16x128xbf16>, vector<128x128xbf16>, vector<16x128xf32> -> vector<16x128xf32>
    %478 = arith.addf %476, %477 : vector<16x128xf32>
    %c7_257 = arith.constant 7 : index
    %c3_258 = arith.constant 3 : index
    %c0_259 = arith.constant 0 : index
    %c0_260 = arith.constant 0 : index
    %479 = vector.load %arg3[%c7_257, %c3_258, %c0_259, %c0_260] : memref<8x4x16x128xbf16, #tpu.memory_space<vmem>>, vector<1x1x16x128xbf16>
    %480 = vector.shape_cast %479 : vector<1x1x16x128xbf16> to vector<16x128xbf16>
    %481 = arith.extf %480 : vector<16x128xbf16> to vector<16x128xf32>
    %cst_261 = arith.constant dense<0.000000e+00> : vector<16x128xf32>
    %482 = tpu.matmul %463, %13, %cst_261 {dimension_numbers = #tpu.dot_dimension_numbers<[1], [0], [0], [1], [0, 0, 1, 1], [], []>} : vector<16x128xbf16>, vector<128x128xbf16>, vector<16x128xf32> -> vector<16x128xf32>
    %483 = arith.addf %481, %482 : vector<16x128xf32>
    %cst_262 = arith.constant 5.000000e-01 : f32
    %484 = vector.broadcast %cst_262 : f32 to vector<16x128xf32>
    %485 = arith.mulf %484, %468 : vector<16x128xf32>
    %486 = math.tanh %485 : vector<16x128xf32>
    %cst_263 = arith.constant 5.000000e-01 : f32
    %487 = vector.broadcast %cst_263 : f32 to vector<16x128xf32>
    %488 = arith.mulf %487, %486 : vector<16x128xf32>
    %cst_264 = arith.constant 5.000000e-01 : f32
    %489 = vector.broadcast %cst_264 : f32 to vector<16x128xf32>
    %490 = arith.addf %488, %489 : vector<16x128xf32>
    %cst_265 = arith.constant 5.000000e-01 : f32
    %491 = vector.broadcast %cst_265 : f32 to vector<16x128xf32>
    %492 = arith.mulf %491, %473 : vector<16x128xf32>
    %493 = math.tanh %492 : vector<16x128xf32>
    %cst_266 = arith.constant 5.000000e-01 : f32
    %494 = vector.broadcast %cst_266 : f32 to vector<16x128xf32>
    %495 = arith.mulf %494, %493 : vector<16x128xf32>
    %cst_267 = arith.constant 5.000000e-01 : f32
    %496 = vector.broadcast %cst_267 : f32 to vector<16x128xf32>
    %497 = arith.addf %495, %496 : vector<16x128xf32>
    %498 = math.tanh %478 : vector<16x128xf32>
    %cst_268 = arith.constant 5.000000e-01 : f32
    %499 = vector.broadcast %cst_268 : f32 to vector<16x128xf32>
    %500 = arith.mulf %499, %483 : vector<16x128xf32>
    %501 = math.tanh %500 : vector<16x128xf32>
    %cst_269 = arith.constant 5.000000e-01 : f32
    %502 = vector.broadcast %cst_269 : f32 to vector<16x128xf32>
    %503 = arith.mulf %502, %501 : vector<16x128xf32>
    %cst_270 = arith.constant 5.000000e-01 : f32
    %504 = vector.broadcast %cst_270 : f32 to vector<16x128xf32>
    %505 = arith.addf %503, %504 : vector<16x128xf32>
    %506 = arith.mulf %497, %455 : vector<16x128xf32>
    %507 = arith.mulf %490, %498 : vector<16x128xf32>
    %508 = arith.addf %506, %507 : vector<16x128xf32>
    %509 = math.tanh %508 : vector<16x128xf32>
    %510 = arith.mulf %505, %509 : vector<16x128xf32>
    %c7_i32 = arith.constant 7 : i32
    %511 = arith.addi %14, %c7_i32 : i32
    %512 = vector.broadcast %511 : i32 to vector<16x1xi32>
    %513 = arith.cmpi sgt, %5, %512 : vector<16x1xi32>
    %514 = vector.shape_cast %513 : vector<16x1xi1> to vector<16x1xi1>
    %515 = vector.broadcast %514 : vector<16x1xi1> to vector<16x128xi1>
    %516 = arith.select %515, %510, %452 : vector<16x128xi1>, vector<16x128xf32>
    %517 = vector.shape_cast %513 : vector<16x1xi1> to vector<16x1xi1>
    %518 = vector.broadcast %517 : vector<16x1xi1> to vector<16x128xi1>
    %519 = arith.select %518, %508, %455 : vector<16x128xi1>, vector<16x128xf32>
    %cst_271 = arith.constant 0.000000e+00 : f32
    %520 = vector.shape_cast %513 : vector<16x1xi1> to vector<16x1xi1>
    %521 = vector.broadcast %520 : vector<16x1xi1> to vector<16x128xi1>
    %522 = vector.broadcast %cst_271 : f32 to vector<16x128xf32>
    %523 = arith.select %521, %510, %522 : vector<16x128xi1>, vector<16x128xf32>
    %c0_272 = arith.constant 0 : index
    %c7_273 = arith.constant 7 : index
    %c0_274 = arith.constant 0 : index
    %524 = vector.load %arg5[%c0_272, %c7_273, %c0_274] : memref<16x8x128xf32, #tpu.memory_space<vmem>>, vector<16x1x128xf32>
    %525 = vector.shape_cast %524 : vector<16x1x128xf32> to vector<16x128xf32>
    %526 = vector.shape_cast %523 : vector<16x128xf32> to vector<16x1x128xf32>
    tpu.vector_store %arg5[%c0_272, %c7_273, %c0_274], %526 {strides = array<i32>} : memref<16x8x128xf32, #tpu.memory_space<vmem>>, vector<16x1x128xf32>,
    %c0_275 = arith.constant 0 : index
    %c0_276 = arith.constant 0 : index
    %527 = vector.load %arg6[%c0_275, %c0_276] : memref<16x128xf32, #tpu.memory_space<vmem>>, vector<16x128xf32>
    tpu.vector_store %arg6[%c0_275, %c0_276], %516 {strides = array<i32>} : memref<16x128xf32, #tpu.memory_space<vmem>>, vector<16x128xf32>,
    %c0_277 = arith.constant 0 : index
    %c0_278 = arith.constant 0 : index
    %528 = vector.load %arg7[%c0_277, %c0_278] : memref<16x128xf32, #tpu.memory_space<vmem>>, vector<16x128xf32>
    tpu.vector_store %arg7[%c0_277, %c0_278], %519 {strides = array<i32>} : memref<16x128xf32, #tpu.memory_space<vmem>>, vector<16x128xf32>,
    return
  }
  func.func @transform_0(%arg0: i32, %arg1: i32) -> (i32, i32) {
    %c0_i32 = arith.constant 0 : i32
    %c0_i32_0 = arith.constant 0 : i32
    return %arg0, %c0_i32 : i32, i32
  }
  func.func @transform_1(%arg0: i32, %arg1: i32) -> (i32, i32, i32, i32) {
    %c0_i32 = arith.constant 0 : i32
    %c0_i32_0 = arith.constant 0 : i32
    %c0_i32_1 = arith.constant 0 : i32
    return %arg1, %c0_i32, %arg0, %c0_i32_0 : i32, i32, i32, i32
  }
  func.func @transform_2(%arg0: i32, %arg1: i32) -> (i32, i32, i32) {
    %c0_i32 = arith.constant 0 : i32
    %c0_i32_0 = arith.constant 0 : i32
    %c0_i32_1 = arith.constant 0 : i32
    %c0_i32_2 = arith.constant 0 : i32
    return %c0_i32, %c0_i32_0, %c0_i32_1 : i32, i32, i32
  }
  func.func @transform_3(%arg0: i32, %arg1: i32) -> (i32, i32, i32) {
    %c0_i32 = arith.constant 0 : i32
    %c0_i32_0 = arith.constant 0 : i32
    return %arg0, %arg1, %c0_i32 : i32, i32, i32
  }
  func.func @transform_4(%arg0: i32, %arg1: i32) -> (i32, i32) {
    %c0_i32 = arith.constant 0 : i32
    %c0_i32_0 = arith.constant 0 : i32
    return %arg0, %c0_i32 : i32, i32
  }
  func.func @transform_5(%arg0: i32, %arg1: i32) -> (i32, i32) {
    %c0_i32 = arith.constant 0 : i32
    %c0_i32_0 = arith.constant 0 : i32
    return %arg0, %c0_i32 : i32, i32
  }
}

</mosaic_0001>

<llo_original>
// kernel: tpu_custom_call.1
$region0: #{tpu_custom_call.1}
  #allocation0 [shape = 'u32[]', space=smem, size = 0x4, offset = 0x4, fixed_abs, tag = 'smem constant byte address 0x4 - core index']
  #allocation1 [shape = 'u32[72,128]{1,0:T(1,128)}', space=vmem, size = 0x9000, scoped, tag = 'internal scratch']
  %s0 = inlined_call_operand.vmem [shape: s32[16,1], index: 0, kind: input, shape index: {}]
  %s1 = inlined_call_operand.hbm [shape: bf16[8,4,16,128], index: 1, kind: input, shape index: {}]
  %s2 = inlined_call_operand.hbm [shape: bf16[4,128,128], index: 2, kind: input, shape index: {}]
  %s3 = inlined_call_operand.hbm [shape: f32[16,8,128], index: 3, kind: output, shape index: {0}]
  %s4 = inlined_call_operand.hbm [shape: f32[16,128], index: 4, kind: output, shape index: {1}]
  %s5 = inlined_call_operand.hbm [shape: f32[16,128], index: 5, kind: output, shape index: {2}]
  %6 = xla_tuple %s3, %s4, %s5
  %s7 = sld [smem:[#allocation0]]
  $region50: #{tpu_custom_call.1} parent=0
    _
  %s9 = ssub.s32 1, %s7
  %s10 = scalar_select 0, %s9, %s7
  $region1: #{tpu_custom_call.1} parent=0
    #allocation2 [shape = 'u8[131072]{0}', space=vmem, size = 0x20000, scoped, tag = 'input window, operand 1, single buffered']
    #allocation3 [shape = 's32[1]{0}', space=sflag, size = 0x4, scoped, tag = 'scoped memory for tpu_custom_call.1']
    #allocation4 [shape = 's32[1]{0}', space=sflag, size = 0x4, scoped, tag = 'scoped memory for tpu_custom_call.1']
    #allocation5 [shape = 'u8[131072]{0}', space=vmem, size = 0x20000, scoped, tag = 'input window, operand 2, single buffered']
    #allocation6 [shape = 's32[1]{0}', space=sflag, size = 0x4, scoped, tag = 'scoped memory for tpu_custom_call.1']
    #allocation7 [shape = 'u8[65536]{0}', space=vmem, size = 0x10000, scoped, tag = 'output window, operand 0, single buffered']
    #allocation8 [shape = 'u8[8192]{0}', space=vmem, size = 0x2000, scoped, tag = 'output window, operand 1, single buffered']
    #allocation9 [shape = 's32[1]{0}', space=sflag, size = 0x4, scoped, tag = 'scoped memory for tpu_custom_call.1']
    #allocation10 [shape = 'u8[8192]{0}', space=vmem, size = 0x2000, scoped, tag = 'output window, operand 2, single buffered']
    %11 = vsyncpa [#allocation3], 0
    %12 = vsyncpa [#allocation6], 0
    %13 = vsyncpa [#allocation4], 0
    %14 = vsyncpa [#allocation9], 0
    // Predicated region
    $region2: #{tpu_custom_call.1} parent=1 // pred_check
      _
    $region3: #{tpu_custom_call.1} parent=1 // pred_check_branch
      %16 = sbr.rel (0) target = $region5
    $region4: #{tpu_custom_call.1} parent=1 // pred_region
      _
    $region5: #{tpu_custom_call.1} parent=1 // pred_fallthru
      _
    // Predicated region
    $region6: #{tpu_custom_call.1} parent=1 // pred_check
      _
    $region7: #{tpu_custom_call.1} parent=1 // pred_check_branch
      %18 = sbr.rel (0) target = $region9
    $region8: #{tpu_custom_call.1} parent=1 // pred_region
      %20 = vsyncadd [#allocation3], 0
      %s21 = sshll.u32 %s1, 4
      %s22 = int_to_ptr.hbm [resolvable:$true] %s21
      %s23 = sshll.u32 [#allocation2], 4
      %s24 = int_to_ptr.vmem [resolvable:$true] %s23
      %29 = dma.hbm_to_vmem [thread:$0]  %s22, 4096, %s24, [#allocation3], 64, 64, 4
    $region9: #{tpu_custom_call.1} parent=1 // pred_fallthru
      _
    // Predicated region
    $region10: #{tpu_custom_call.1} parent=1 // pred_check
      _
    $region11: #{tpu_custom_call.1} parent=1 // pred_check_branch
      %31 = sbr.rel (0) target = $region13
    $region12: #{tpu_custom_call.1} parent=1 // pred_region
      %33 = vsyncadd [#allocation6], 0
      %s34 = sshll.u32 %s2, 4
      %s35 = int_to_ptr.hbm [resolvable:$true] %s34
      %s36 = sshll.u32 [#allocation5], 4
      %s37 = int_to_ptr.vmem [resolvable:$true] %s36
      %42 = dma.hbm_to_vmem [thread:$0]  %s35, 4096, %s37, [#allocation6], 64, 64, 4
    $region13: #{tpu_custom_call.1} parent=1 // pred_fallthru
      _
    // Predicated region
    $region14: #{tpu_custom_call.1} parent=1 // pred_check
      _
    $region15: #{tpu_custom_call.1} parent=1 // pred_check_branch
      %44 = sbr.rel (0) target = $region17
    $region16: #{tpu_custom_call.1} parent=1 // pred_region
      %46 = dma.done [#allocation3], 4096
    $region17: #{tpu_custom_call.1} parent=1 // pred_fallthru
      _
    // Predicated region
    $region18: #{tpu_custom_call.1} parent=1 // pred_check
      _
    $region19: #{tpu_custom_call.1} parent=1 // pred_check_branch
      %48 = sbr.rel (0) target = $region21
    $region20: #{tpu_custom_call.1} parent=1 // pred_region
      %50 = dma.done [#allocation6], 4096
    $region21: #{tpu_custom_call.1} parent=1 // pred_fallthru
      _
    %p51 = scmp.eq.s32.totalorder 0, 0
    // Predicated region
    $region22: #{tpu_custom_call.1} parent=1 // pred_check
      %p52 = pneg %p51
    $region23: #{tpu_custom_call.1} parent=1 // pred_check_branch
      %54 = sbr.rel (%p52) target = $region25
    $region24: #{tpu_custom_call.1} parent=1 // pred_region
      %55 = vst [vmem:[#allocation8] sm:$0xff] 0.0
      %56 = vst [vmem:[#allocation8 + $0x8] sm:$0xff] 0.0
      %57 = vst [vmem:[#allocation10] sm:$0xff] 0.0
      %58 = vst [vmem:[#allocation10 + $0x8] sm:$0xff] 0.0
    $region25: #{tpu_custom_call.1} parent=1 // pred_fallthru
      _
    %v59 = vld [vmem:[#allocation8] sm:$0xff]
    %v60 = vld [vmem:[#allocation8 + $0x8] sm:$0xff]
    %v61 = vld [vmem:[#allocation10] sm:$0xff]
    %v62 = vld [vmem:[#allocation10 + $0x8] sm:$0xff]
    %v63 = vld [vmem:[%s0] sm:$0xff]
    %v64 = vld [vmem:[%s0 + $0x8] sm:$0xff]
    %v65 = vld [vmem:[#allocation5] sm:$0xf]
    %v66 = vld [vmem:[#allocation5 + $0x4] sm:$0xf]
    %v67 = vld [vmem:[#allocation5 + $0x8] sm:$0xf]
    %v68 = vld [vmem:[#allocation5 + $0xc] sm:$0xf]
    %v69 = vld [vmem:[#allocation5 + $0x10] sm:$0xf]
    %v70 = vld [vmem:[#allocation5 + $0x14] sm:$0xf]
    %v71 = vld [vmem:[#allocation5 + $0x18] sm:$0xf]
    %v72 = vld [vmem:[#allocation5 + $0x1c] sm:$0xf]
    %v73 = vld [vmem:[#allocation5 + $0x20] sm:$0xf]
    %v74 = vld [vmem:[#allocation5 + $0x24] sm:$0xf]
    %v75 = vld [vmem:[#allocation5 + $0x28] sm:$0xf]
    %v76 = vld [vmem:[#allocation5 + $0x2c] sm:$0xf]
    %v77 = vld [vmem:[#allocation5 + $0x30] sm:$0xf]
    %v78 = vld [vmem:[#allocation5 + $0x34] sm:$0xf]
    %v79 = vld [vmem:[#allocation5 + $0x38] sm:$0xf]
    %v80 = vld [vmem:[#allocation5 + $0x3c] sm:$0xf]
    %s81 = scalar_lea.vmem [#allocation5], 64
    %v82 = vld [vmem:[%s81] sm:$0xf]
    %v83 = vld [vmem:[%s81 + $0x4] sm:$0xf]
    %v84 = vld [vmem:[%s81 + $0x8] sm:$0xf]
    %v85 = vld [vmem:[%s81 + $0xc] sm:$0xf]
    %v86 = vld [vmem:[%s81 + $0x10] sm:$0xf]
    %v87 = vld [vmem:[%s81 + $0x14] sm:$0xf]
    %v88 = vld [vmem:[%s81 + $0x18] sm:$0xf]
    %v89 = vld [vmem:[%s81 + $0x1c] sm:$0xf]
    %v90 = vld [vmem:[%s81 + $0x20] sm:$0xf]
    %v91 = vld [vmem:[%s81 + $0x24] sm:$0xf]
    %v92 = vld [vmem:[%s81 + $0x28] sm:$0xf]
    %v93 = vld [vmem:[%s81 + $0x2c] sm:$0xf]
    %v94 = vld [vmem:[%s81 + $0x30] sm:$0xf]
    %v95 = vld [vmem:[%s81 + $0x34] sm:$0xf]
    %v96 = vld [vmem:[%s81 + $0x38] sm:$0xf]
    %v97 = vld [vmem:[%s81 + $0x3c] sm:$0xf]
    %s98 = scalar_lea.vmem [#allocation5], 128
    %v99 = vld [vmem:[%s98] sm:$0xf]
    %v100 = vld [vmem:[%s98 + $0x4] sm:$0xf]
    %v101 = vld [vmem:[%s98 + $0x8] sm:$0xf]
    %v102 = vld [vmem:[%s98 + $0xc] sm:$0xf]
    %v103 = vld [vmem:[%s98 + $0x10] sm:$0xf]
    %v104 = vld [vmem:[%s98 + $0x14] sm:$0xf]
    %v105 = vld [vmem:[%s98 + $0x18] sm:$0xf]
    %v106 = vld [vmem:[%s98 + $0x1c] sm:$0xf]
    %v107 = vld [vmem:[%s98 + $0x20] sm:$0xf]
    %v108 = vld [vmem:[%s98 + $0x24] sm:$0xf]
    %v109 = vld [vmem:[%s98 + $0x28] sm:$0xf]
    %v110 = vld [vmem:[%s98 + $0x2c] sm:$0xf]
    %v111 = vld [vmem:[%s98 + $0x30] sm:$0xf]
    %v112 = vld [vmem:[%s98 + $0x34] sm:$0xf]
    %v113 = vld [vmem:[%s98 + $0x38] sm:$0xf]
    %v114 = vld [vmem:[%s98 + $0x3c] sm:$0xf]
    %s115 = scalar_lea.vmem [#allocation5], 192
    %v116 = vld [vmem:[%s115] sm:$0xf]
    %v117 = vld [vmem:[%s115 + $0x4] sm:$0xf]
    %v118 = vld [vmem:[%s115 + $0x8] sm:$0xf]
    %v119 = vld [vmem:[%s115 + $0xc] sm:$0xf]
    %v120 = vld [vmem:[%s115 + $0x10] sm:$0xf]
    %v121 = vld [vmem:[%s115 + $0x14] sm:$0xf]
    %v122 = vld [vmem:[%s115 + $0x18] sm:$0xf]
    %v123 = vld [vmem:[%s115 + $0x1c] sm:$0xf]
    %v124 = vld [vmem:[%s115 + $0x20] sm:$0xf]
    %v125 = vld [vmem:[%s115 + $0x24] sm:$0xf]
    %v126 = vld [vmem:[%s115 + $0x28] sm:$0xf]
    %v127 = vld [vmem:[%s115 + $0x2c] sm:$0xf]
    %v128 = vld [vmem:[%s115 + $0x30] sm:$0xf]
    %v129 = vld [vmem:[%s115 + $0x34] sm:$0xf]
    %v130 = vld [vmem:[%s115 + $0x38] sm:$0xf]
    %v131 = vld [vmem:[%s115 + $0x3c] sm:$0xf]
    %s132 = smul.u32 0, 8
    %v133 = vpack.c.bf16 %v60, %v59
    %v134 = vld [vmem:[#allocation2] sm:$0xf]
    %v135 = vld [vmem:[#allocation2 + $0x4] sm:$0xf]
    %v136 = vunpack.c.l.bf16 %v134
    %v137 = vunpack.c.l.bf16 %v135
    %v154 = vunpack.c.l.b16 %v65
    %v155 = vunpack.c.l.b16 %v66
    %v156 = vunpack.c.l.b16 %v67
    %v157 = vunpack.c.l.b16 %v68
    %v158 = vunpack.c.l.b16 %v69
    %v159 = vunpack.c.l.b16 %v70
    %v160 = vunpack.c.l.b16 %v71
    %v161 = vunpack.c.l.b16 %v72
    %v162 = vunpack.c.l.b16 %v73
    %v163 = vunpack.c.l.b16 %v74
    %v164 = vunpack.c.l.b16 %v75
    %v165 = vunpack.c.l.b16 %v76
    %v166 = vunpack.c.l.b16 %v77
    %v167 = vunpack.c.l.b16 %v78
    %v168 = vunpack.c.l.b16 %v79
    %v169 = vunpack.c.l.b16 %v80
    %v170 = vpack.c.b16 %v155, %v154
    %v171 = vpack.c.b16 %v157, %v156
    %v172 = vpack.c.b16 %v159, %v158
    %v173 = vpack.c.b16 %v161, %v160
    %v174 = vpack.c.b16 %v163, %v162
    %v175 = vpack.c.b16 %v165, %v164
    %v176 = vpack.c.b16 %v167, %v166
    %v177 = vpack.c.b16 %v169, %v168
    %186 = vmatpush.bf16.msra.mxu0 %v177
    %187 = vmatpush.bf16.msra.mxu0 %v176
    %188 = vmatpush.bf16.msra.mxu0 %v175
    %189 = vmatpush.bf16.msra.mxu0 %v174
    %190 = vmatpush.bf16.msra.mxu0 %v173
    %191 = vmatpush.bf16.msra.mxu0 %v172
    %192 = vmatpush.bf16.msra.mxu0 %v171
    %193 = vmatpush.bf16.msra.mxu0 %v170
    %194 = vmatmul.bf16.gmra.mxu0 %v133
    %v195 = vpop.f32.mrf.mxu0
    %v196 = vadd.f32 0.0, %v195
    %v197 = vpop.f32.mrf.mxu0
    %v198 = vadd.f32 0.0, %v197
    %199 = vdwg.mxu0
    %v200 = vadd.f32 %v136, %v196
    %v201 = vadd.f32 %v137, %v198
    %s202 = scalar_lea.vmem [#allocation2], 8
    %v203 = vld [vmem:[%s202] sm:$0xf]
    %v204 = vld [vmem:[%s202 + $0x4] sm:$0xf]
    %v205 = vunpack.c.l.bf16 %v203
    %v206 = vunpack.c.l.bf16 %v204
    %v223 = vunpack.c.l.b16 %v82
    %v224 = vunpack.c.l.b16 %v83
    %v225 = vunpack.c.l.b16 %v84
    %v226 = vunpack.c.l.b16 %v85
    %v227 = vunpack.c.l.b16 %v86
    %v228 = vunpack.c.l.b16 %v87
    %v229 = vunpack.c.l.b16 %v88
    %v230 = vunpack.c.l.b16 %v89
    %v231 = vunpack.c.l.b16 %v90
    %v232 = vunpack.c.l.b16 %v91
    %v233 = vunpack.c.l.b16 %v92
    %v234 = vunpack.c.l.b16 %v93
    %v235 = vunpack.c.l.b16 %v94
    %v236 = vunpack.c.l.b16 %v95
    %v237 = vunpack.c.l.b16 %v96
    %v238 = vunpack.c.l.b16 %v97
    %v239 = vpack.c.b16 %v224, %v223
    %v240 = vpack.c.b16 %v226, %v225
    %v241 = vpack.c.b16 %v228, %v227
    %v242 = vpack.c.b16 %v230, %v229
    %v243 = vpack.c.b16 %v232, %v231
    %v244 = vpack.c.b16 %v234, %v233
    %v245 = vpack.c.b16 %v236, %v235
    %v246 = vpack.c.b16 %v238, %v237
    %255 = vmatpush.bf16.msra.mxu0 %v246
    %256 = vmatpush.bf16.msra.mxu0 %v245
    %257 = vmatpush.bf16.msra.mxu0 %v244
    %258 = vmatpush.bf16.msra.mxu0 %v243
    %259 = vmatpush.bf16.msra.mxu0 %v242
    %260 = vmatpush.bf16.msra.mxu0 %v241
    %261 = vmatpush.bf16.msra.mxu0 %v240
    %262 = vmatpush.bf16.msra.mxu0 %v239
    %263 = vmatmul.bf16.gmra.mxu0 %v133
    %v264 = vpop.f32.mrf.mxu0
    %v265 = vadd.f32 0.0, %v264
    %v266 = vpop.f32.mrf.mxu0
    %v267 = vadd.f32 0.0, %v266
    %268 = vdwg.mxu0
    %v269 = vadd.f32 %v205, %v265
    %v270 = vadd.f32 %v206, %v267
    %s271 = scalar_lea.vmem [#allocation2], 16
    %v272 = vld [vmem:[%s271] sm:$0xf]
    %v273 = vld [vmem:[%s271 + $0x4] sm:$0xf]
    %v274 = vunpack.c.l.bf16 %v272
    %v275 = vunpack.c.l.bf16 %v273
    %v292 = vunpack.c.l.b16 %v99
    %v293 = vunpack.c.l.b16 %v100
    %v294 = vunpack.c.l.b16 %v101
    %v295 = vunpack.c.l.b16 %v102
    %v296 = vunpack.c.l.b16 %v103
    %v297 = vunpack.c.l.b16 %v104
    %v298 = vunpack.c.l.b16 %v105
    %v299 = vunpack.c.l.b16 %v106
    %v300 = vunpack.c.l.b16 %v107
    %v301 = vunpack.c.l.b16 %v108
    %v302 = vunpack.c.l.b16 %v109
    %v303 = vunpack.c.l.b16 %v110
    %v304 = vunpack.c.l.b16 %v111
    %v305 = vunpack.c.l.b16 %v112
    %v306 = vunpack.c.l.b16 %v113
    %v307 = vunpack.c.l.b16 %v114
    %v308 = vpack.c.b16 %v293, %v292
    %v309 = vpack.c.b16 %v295, %v294
    %v310 = vpack.c.b16 %v297, %v296
    %v311 = vpack.c.b16 %v299, %v298
    %v312 = vpack.c.b16 %v301, %v300
    %v313 = vpack.c.b16 %v303, %v302
    %v314 = vpack.c.b16 %v305, %v304
    %v315 = vpack.c.b16 %v307, %v306
    %324 = vmatpush.bf16.msra.mxu0 %v315
    %325 = vmatpush.bf16.msra.mxu0 %v314
    %326 = vmatpush.bf16.msra.mxu0 %v313
    %327 = vmatpush.bf16.msra.mxu0 %v312
    %328 = vmatpush.bf16.msra.mxu0 %v311
    %329 = vmatpush.bf16.msra.mxu0 %v310
    %330 = vmatpush.bf16.msra.mxu0 %v309
    %331 = vmatpush.bf16.msra.mxu0 %v308
    %332 = vmatmul.bf16.gmra.mxu0 %v133
    %v333 = vpop.f32.mrf.mxu0
    %v334 = vadd.f32 0.0, %v333
    %v335 = vpop.f32.mrf.mxu0
    %v336 = vadd.f32 0.0, %v335
    %337 = vdwg.mxu0
    %v338 = vadd.f32 %v274, %v334
    %v339 = vadd.f32 %v275, %v336
    %s340 = scalar_lea.vmem [#allocation2], 24
    %v341 = vld [vmem:[%s340] sm:$0xf]
    %v342 = vld [vmem:[%s340 + $0x4] sm:$0xf]
    %v343 = vunpack.c.l.bf16 %v341
    %v344 = vunpack.c.l.bf16 %v342
    %v361 = vunpack.c.l.b16 %v116
    %v362 = vunpack.c.l.b16 %v117
    %v363 = vunpack.c.l.b16 %v118
    %v364 = vunpack.c.l.b16 %v119
    %v365 = vunpack.c.l.b16 %v120
    %v366 = vunpack.c.l.b16 %v121
    %v367 = vunpack.c.l.b16 %v122
    %v368 = vunpack.c.l.b16 %v123
    %v369 = vunpack.c.l.b16 %v124
    %v370 = vunpack.c.l.b16 %v125
    %v371 = vunpack.c.l.b16 %v126
    %v372 = vunpack.c.l.b16 %v127
    %v373 = vunpack.c.l.b16 %v128
    %v374 = vunpack.c.l.b16 %v129
    %v375 = vunpack.c.l.b16 %v130
    %v376 = vunpack.c.l.b16 %v131
    %v377 = vpack.c.b16 %v362, %v361
    %v378 = vpack.c.b16 %v364, %v363
    %v379 = vpack.c.b16 %v366, %v365
    %v380 = vpack.c.b16 %v368, %v367
    %v381 = vpack.c.b16 %v370, %v369
    %v382 = vpack.c.b16 %v372, %v371
    %v383 = vpack.c.b16 %v374, %v373
    %v384 = vpack.c.b16 %v376, %v375
    %393 = vmatpush.bf16.msra.mxu0 %v384
    %394 = vmatpush.bf16.msra.mxu0 %v383
    %395 = vmatpush.bf16.msra.mxu0 %v382
    %396 = vmatpush.bf16.msra.mxu0 %v381
    %397 = vmatpush.bf16.msra.mxu0 %v380
    %398 = vmatpush.bf16.msra.mxu0 %v379
    %399 = vmatpush.bf16.msra.mxu0 %v378
    %400 = vmatpush.bf16.msra.mxu0 %v377
    %401 = vmatmul.bf16.gmra.mxu0 %v133
    %v402 = vpop.f32.mrf.mxu0
    %v403 = vadd.f32 0.0, %v402
    %v404 = vpop.f32.mrf.mxu0
    %v405 = vadd.f32 0.0, %v404
    %406 = vdwg.mxu0
    %v407 = vadd.f32 %v343, %v403
    %v408 = vadd.f32 %v344, %v405
    %v409 = vmul.f32 %v200, 0.5
    %v410 = vmul.f32 %v201, 0.5
    %v411 = vtanh.pop %v409
    %v412 = vtanh.pop %v410
    %v413 = vmul.f32 %v411, 0.5
    %v414 = vmul.f32 %v412, 0.5
    %v415 = vadd.f32 %v413, 0.5
    %v416 = vadd.f32 %v414, 0.5
    %v417 = vmul.f32 %v269, 0.5
    %v418 = vmul.f32 %v270, 0.5
    %v419 = vtanh.pop %v417
    %v420 = vtanh.pop %v418
    %v421 = vmul.f32 %v419, 0.5
    %v422 = vmul.f32 %v420, 0.5
    %v423 = vadd.f32 %v421, 0.5
    %v424 = vadd.f32 %v422, 0.5
    %v425 = vtanh.pop %v338
    %v426 = vtanh.pop %v339
    %v427 = vmul.f32 %v407, 0.5
    %v428 = vmul.f32 %v408, 0.5
    %v429 = vtanh.pop %v427
    %v430 = vtanh.pop %v428
    %v431 = vmul.f32 %v429, 0.5
    %v432 = vmul.f32 %v430, 0.5
    %v433 = vadd.f32 %v431, 0.5
    %v434 = vadd.f32 %v432, 0.5
    %v435 = vmul.f32 %v423, %v61
    %v436 = vmul.f32 %v424, %v62
    %v437 = vmul.f32 %v415, %v425
    %v438 = vmul.f32 %v416, %v426
    %v439 = vadd.f32 %v435, %v437
    %v440 = vadd.f32 %v436, %v438
    %v441 = vtanh.pop %v439
    %v442 = vtanh.pop %v440
    %v443 = vmul.f32 %v433, %v441
    %v444 = vmul.f32 %v434, %v442
    %v445 = vstv %s132
    %vm446 = vcmp.gt.s32.totalorder %v63, %v445
    %vm447 = vcmp.gt.s32.totalorder %v64, %v445
    %v448 = vsel %vm446, 1, 0
    %v449 = vsel %vm447, 1, 0
    %450 = vset.pattern.permute.xlu0 0
    %451 = vperm.xlu0 %450, %v448
    %v452 = vpop.permute.xlu0 %451
    %453 = vset.pattern.permute.xlu0 0
    %454 = vperm.xlu0 %453, %v449
    %v455 = vpop.permute.xlu0 %454
    %vm456 = vcmp.eq.s32.totalorder %v452, 1
    %vm457 = vcmp.eq.s32.totalorder %v455, 1
    %v458 = vsel %vm456, %v443, %v59
    %v459 = vsel %vm457, %v444, %v60
    %v460 = vsel %vm456, %v439, %v61
    %v461 = vsel %vm457, %v440, %v62
    %v462 = vsel %vm456, %v443, 0.0
    %v463 = vsel %vm457, %v444, 0.0
    %v466 = vrot.slane %v462, 1
    %v467 = vrot.slane %v462, 2
    %v468 = vrot.slane %v462, 3
    %v469 = vrot.slane %v462, 4
    %v470 = vrot.slane %v462, 5
    %v471 = vrot.slane %v462, 6
    %v472 = vrot.slane %v462, 7
    %v473 = vrot.slane %v463, 1
    %v474 = vrot.slane %v463, 2
    %v475 = vrot.slane %v463, 3
    %v476 = vrot.slane %v463, 4
    %v477 = vrot.slane %v463, 5
    %v478 = vrot.slane %v463, 6
    %v479 = vrot.slane %v463, 7
    %494 = vst [vmem:[#allocation7] sm:$0x1] %v462
    %495 = vst [vmem:[#allocation7 + $0x8] sm:$0x1] %v466
    %496 = vst [vmem:[#allocation7 + $0x10] sm:$0x1] %v467
    %497 = vst [vmem:[#allocation7 + $0x18] sm:$0x1] %v468
    %498 = vst [vmem:[#allocation7 + $0x20] sm:$0x1] %v469
    %499 = vst [vmem:[#allocation7 + $0x28] sm:$0x1] %v470
    %500 = vst [vmem:[#allocation7 + $0x30] sm:$0x1] %v471
    %501 = vst [vmem:[#allocation7 + $0x38] sm:$0x1] %v472
    %502 = vst [vmem:[#allocation7 + $0x40] sm:$0x1] %v463
    %503 = vst [vmem:[#allocation7 + $0x48] sm:$0x1] %v473
    %504 = vst [vmem:[#allocation7 + $0x50] sm:$0x1] %v474
    %505 = vst [vmem:[#allocation7 + $0x58] sm:$0x1] %v475
    %506 = vst [vmem:[#allocation7 + $0x60] sm:$0x1] %v476
    %507 = vst [vmem:[#allocation7 + $0x68] sm:$0x1] %v477
    %508 = vst [vmem:[#allocation7 + $0x70] sm:$0x1] %v478
    %509 = vst [vmem:[#allocation7 + $0x78] sm:$0x1] %v479
    %v510 = vpack.c.bf16 %v459, %v458
    %s511 = scalar_lea.vmem [#allocation2], 32
    %v512 = vld [vmem:[%s511] sm:$0xf]
    %v513 = vld [vmem:[%s511 + $0x4] sm:$0xf]
    %v514 = vunpack.c.l.bf16 %v512
    %v515 = vunpack.c.l.bf16 %v513
    %516 = vmatpush.bf16.msra.mxu0 %v177
    %517 = vmatpush.bf16.msra.mxu0 %v176
    %518 = vmatpush.bf16.msra.mxu0 %v175
    %519 = vmatpush.bf16.msra.mxu0 %v174
    %520 = vmatpush.bf16.msra.mxu0 %v173
    %521 = vmatpush.bf16.msra.mxu0 %v172
    %522 = vmatpush.bf16.msra.mxu0 %v171
    %523 = vmatpush.bf16.msra.mxu0 %v170
    %524 = vmatmul.bf16.gmra.mxu0 %v510
    %v525 = vpop.f32.mrf.mxu0
    %v526 = vadd.f32 0.0, %v525
    %v527 = vpop.f32.mrf.mxu0
    %v528 = vadd.f32 0.0, %v527
    %529 = vdwg.mxu0
    %v530 = vadd.f32 %v514, %v526
    %v531 = vadd.f32 %v515, %v528
    %s532 = scalar_lea.vmem [#allocation2], 40
    %v533 = vld [vmem:[%s532] sm:$0xf]
    %v534 = vld [vmem:[%s532 + $0x4] sm:$0xf]
    %v535 = vunpack.c.l.bf16 %v533
    %v536 = vunpack.c.l.bf16 %v534
    %537 = vmatpush.bf16.msra.mxu0 %v246
    %538 = vmatpush.bf16.msra.mxu0 %v245
    %539 = vmatpush.bf16.msra.mxu0 %v244
    %540 = vmatpush.bf16.msra.mxu0 %v243
    %541 = vmatpush.bf16.msra.mxu0 %v242
    %542 = vmatpush.bf16.msra.mxu0 %v241
    %543 = vmatpush.bf16.msra.mxu0 %v240
    %544 = vmatpush.bf16.msra.mxu0 %v239
    %545 = vmatmul.bf16.gmra.mxu0 %v510
    %v546 = vpop.f32.mrf.mxu0
    %v547 = vadd.f32 0.0, %v546
    %v548 = vpop.f32.mrf.mxu0
    %v549 = vadd.f32 0.0, %v548
    %550 = vdwg.mxu0
    %v551 = vadd.f32 %v535, %v547
    %v552 = vadd.f32 %v536, %v549
    %s553 = scalar_lea.vmem [#allocation2], 48
    %v554 = vld [vmem:[%s553] sm:$0xf]
    %v555 = vld [vmem:[%s553 + $0x4] sm:$0xf]
    %v556 = vunpack.c.l.bf16 %v554
    %v557 = vunpack.c.l.bf16 %v555
    %558 = vmatpush.bf16.msra.mxu0 %v315
    %559 = vmatpush.bf16.msra.mxu0 %v314
    %560 = vmatpush.bf16.msra.mxu0 %v313
    %561 = vmatpush.bf16.msra.mxu0 %v312
    %562 = vmatpush.bf16.msra.mxu0 %v311
    %563 = vmatpush.bf16.msra.mxu0 %v310
    %564 = vmatpush.bf16.msra.mxu0 %v309
    %565 = vmatpush.bf16.msra.mxu0 %v308
    %566 = vmatmul.bf16.gmra.mxu0 %v510
    %v567 = vpop.f32.mrf.mxu0
    %v568 = vadd.f32 0.0, %v567
    %v569 = vpop.f32.mrf.mxu0
    %v570 = vadd.f32 0.0, %v569
    %571 = vdwg.mxu0
    %v572 = vadd.f32 %v556, %v568
    %v573 = vadd.f32 %v557, %v570
    %s574 = scalar_lea.vmem [#allocation2], 56
    %v575 = vld [vmem:[%s574] sm:$0xf]
    %v576 = vld [vmem:[%s574 + $0x4] sm:$0xf]
    %v577 = vunpack.c.l.bf16 %v575
    %v578 = vunpack.c.l.bf16 %v576
    %579 = vmatpush.bf16.msra.mxu0 %v384
    %580 = vmatpush.bf16.msra.mxu0 %v383
    %581 = vmatpush.bf16.msra.mxu0 %v382
    %582 = vmatpush.bf16.msra.mxu0 %v381
    %583 = vmatpush.bf16.msra.mxu0 %v380
    %584 = vmatpush.bf16.msra.mxu0 %v379
    %585 = vmatpush.bf16.msra.mxu0 %v378
    %586 = vmatpush.bf16.msra.mxu0 %v377
    %587 = vmatmul.bf16.gmra.mxu0 %v510
    %v588 = vpop.f32.mrf.mxu0
    %v589 = vadd.f32 0.0, %v588
    %v590 = vpop.f32.mrf.mxu0
    %v591 = vadd.f32 0.0, %v590
    %592 = vdwg.mxu0
    %v593 = vadd.f32 %v577, %v589
    %v594 = vadd.f32 %v578, %v591
    %v595 = vmul.f32 %v530, 0.5
    %v596 = vmul.f32 %v531, 0.5
    %v597 = vtanh.pop %v595
    %v598 = vtanh.pop %v596
    %v599 = vmul.f32 %v597, 0.5
    %v600 = vmul.f32 %v598, 0.5
    %v601 = vadd.f32 %v599, 0.5
    %v602 = vadd.f32 %v600, 0.5
    %v603 = vmul.f32 %v551, 0.5
    %v604 = vmul.f32 %v552, 0.5
    %v605 = vtanh.pop %v603
    %v606 = vtanh.pop %v604
    %v607 = vmul.f32 %v605, 0.5
    %v608 = vmul.f32 %v606, 0.5
    %v609 = vadd.f32 %v607, 0.5
    %v610 = vadd.f32 %v608, 0.5
    %v611 = vtanh.pop %v572
    %v612 = vtanh.pop %v573
    %v613 = vmul.f32 %v593, 0.5
    %v614 = vmul.f32 %v594, 0.5
    %v615 = vtanh.pop %v613
    %v616 = vtanh.pop %v614
    %v617 = vmul.f32 %v615, 0.5
    %v618 = vmul.f32 %v616, 0.5
    %v619 = vadd.f32 %v617, 0.5
    %v620 = vadd.f32 %v618, 0.5
    %v621 = vmul.f32 %v609, %v460
    %v622 = vmul.f32 %v610, %v461
    %v623 = vmul.f32 %v601, %v611
    %v624 = vmul.f32 %v602, %v612
    %v625 = vadd.f32 %v621, %v623
    %v626 = vadd.f32 %v622, %v624
    %v627 = vtanh.pop %v625
    %v628 = vtanh.pop %v626
    %v629 = vmul.f32 %v619, %v627
    %v630 = vmul.f32 %v620, %v628
    %s631 = sadd.s32 %s132, 1
    %v632 = vstv %s631
    %vm633 = vcmp.gt.s32.totalorder %v63, %v632
    %vm634 = vcmp.gt.s32.totalorder %v64, %v632
    %v635 = vsel %vm633, 1, 0
    %v636 = vsel %vm634, 1, 0
    %637 = vset.pattern.permute.xlu0 0
    %638 = vperm.xlu0 %637, %v635
    %v639 = vpop.permute.xlu0 %638
    %640 = vset.pattern.permute.xlu0 0
    %641 = vperm.xlu0 %640, %v636
    %v642 = vpop.permute.xlu0 %641
    %vm643 = vcmp.eq.s32.totalorder %v639, 1
    %vm644 = vcmp.eq.s32.totalorder %v642, 1
    %v645 = vsel %vm643, %v629, %v458
    %v646 = vsel %vm644, %v630, %v459
    %v647 = vsel %vm643, %v625, %v460
    %v648 = vsel %vm644, %v626, %v461
    %v649 = vsel %vm643, %v629, 0.0
    %v650 = vsel %vm644, %v630, 0.0
    %v653 = vrot.slane %v649, 1
    %v654 = vrot.slane %v649, 2
    %v655 = vrot.slane %v649, 3
    %v656 = vrot.slane %v649, 4
    %v657 = vrot.slane %v649, 5
    %v658 = vrot.slane %v649, 6
    %v659 = vrot.slane %v649, 7
    %v660 = vrot.slane %v650, 1
    %v661 = vrot.slane %v650, 2
    %v662 = vrot.slane %v650, 3
    %v663 = vrot.slane %v650, 4
    %v664 = vrot.slane %v650, 5
    %v665 = vrot.slane %v650, 6
    %v666 = vrot.slane %v650, 7
    %681 = vst [vmem:[#allocation7 + $0x1] sm:$0x1] %v649
    %682 = vst [vmem:[#allocation7 + $0x9] sm:$0x1] %v653
    %683 = vst [vmem:[#allocation7 + $0x11] sm:$0x1] %v654
    %684 = vst [vmem:[#allocation7 + $0x19] sm:$0x1] %v655
    %685 = vst [vmem:[#allocation7 + $0x21] sm:$0x1] %v656
    %686 = vst [vmem:[#allocation7 + $0x29] sm:$0x1] %v657
    %687 = vst [vmem:[#allocation7 + $0x31] sm:$0x1] %v658
    %688 = vst [vmem:[#allocation7 + $0x39] sm:$0x1] %v659
    %689 = vst [vmem:[#allocation7 + $0x41] sm:$0x1] %v650
    %690 = vst [vmem:[#allocation7 + $0x49] sm:$0x1] %v660
    %691 = vst [vmem:[#allocation7 + $0x51] sm:$0x1] %v661
    %692 = vst [vmem:[#allocation7 + $0x59] sm:$0x1] %v662
    %693 = vst [vmem:[#allocation7 + $0x61] sm:$0x1] %v663
    %694 = vst [vmem:[#allocation7 + $0x69] sm:$0x1] %v664
    %695 = vst [vmem:[#allocation7 + $0x71] sm:$0x1] %v665
    %696 = vst [vmem:[#allocation7 + $0x79] sm:$0x1] %v666
    %v697 = vpack.c.bf16 %v646, %v645
    %s698 = scalar_lea.vmem [#allocation2], 64
    %v699 = vld [vmem:[%s698] sm:$0xf]
    %v700 = vld [vmem:[%s698 + $0x4] sm:$0xf]
    %v701 = vunpack.c.l.bf16 %v699
    %v702 = vunpack.c.l.bf16 %v700
    %703 = vmatpush.bf16.msra.mxu0 %v177
    %704 = vmatpush.bf16.msra.mxu0 %v176
    %705 = vmatpush.bf16.msra.mxu0 %v175
    %706 = vmatpush.bf16.msra.mxu0 %v174
    %707 = vmatpush.bf16.msra.mxu0 %v173
    %708 = vmatpush.bf16.msra.mxu0 %v172
    %709 = vmatpush.bf16.msra.mxu0 %v171
    %710 = vmatpush.bf16.msra.mxu0 %v170
    %711 = vmatmul.bf16.gmra.mxu0 %v697
    %v712 = vpop.f32.mrf.mxu0
    %v713 = vadd.f32 0.0, %v712
    %v714 = vpop.f32.mrf.mxu0
    %v715 = vadd.f32 0.0, %v714
    %716 = vdwg.mxu0
    %v717 = vadd.f32 %v701, %v713
    %v718 = vadd.f32 %v702, %v715
    %s719 = scalar_lea.vmem [#allocation2], 72
    %v720 = vld [vmem:[%s719] sm:$0xf]
    %v721 = vld [vmem:[%s719 + $0x4] sm:$0xf]
    %v722 = vunpack.c.l.bf16 %v720
    %v723 = vunpack.c.l.bf16 %v721
    %724 = vmatpush.bf16.msra.mxu0 %v246
    %725 = vmatpush.bf16.msra.mxu0 %v245
    %726 = vmatpush.bf16.msra.mxu0 %v244
    %727 = vmatpush.bf16.msra.mxu0 %v243
    %728 = vmatpush.bf16.msra.mxu0 %v242
    %729 = vmatpush.bf16.msra.mxu0 %v241
    %730 = vmatpush.bf16.msra.mxu0 %v240
    %731 = vmatpush.bf16.msra.mxu0 %v239
    %732 = vmatmul.bf16.gmra.mxu0 %v697
    %v733 = vpop.f32.mrf.mxu0
    %v734 = vadd.f32 0.0, %v733
    %v735 = vpop.f32.mrf.mxu0
    %v736 = vadd.f32 0.0, %v735
    %737 = vdwg.mxu0
    %v738 = vadd.f32 %v722, %v734
    %v739 = vadd.f32 %v723, %v736
    %s740 = scalar_lea.vmem [#allocation2], 80
    %v741 = vld [vmem:[%s740] sm:$0xf]
    %v742 = vld [vmem:[%s740 + $0x4] sm:$0xf]
    %v743 = vunpack.c.l.bf16 %v741
    %v744 = vunpack.c.l.bf16 %v742
    %745 = vmatpush.bf16.msra.mxu0 %v315
    %746 = vmatpush.bf16.msra.mxu0 %v314
    %747 = vmatpush.bf16.msra.mxu0 %v313
    %748 = vmatpush.bf16.msra.mxu0 %v312
    %749 = vmatpush.bf16.msra.mxu0 %v311
    %750 = vmatpush.bf16.msra.mxu0 %v310
    %751 = vmatpush.bf16.msra.mxu0 %v309
    %752 = vmatpush.bf16.msra.mxu0 %v308
    %753 = vmatmul.bf16.gmra.mxu0 %v697
    %v754 = vpop.f32.mrf.mxu0
    %v755 = vadd.f32 0.0, %v754
    %v756 = vpop.f32.mrf.mxu0
    %v757 = vadd.f32 0.0, %v756
    %758 = vdwg.mxu0
    %v759 = vadd.f32 %v743, %v755
    %v760 = vadd.f32 %v744, %v757
    %s761 = scalar_lea.vmem [#allocation2], 88
    %v762 = vld [vmem:[%s761] sm:$0xf]
    %v763 = vld [vmem:[%s761 + $0x4] sm:$0xf]
    %v764 = vunpack.c.l.bf16 %v762
    %v765 = vunpack.c.l.bf16 %v763
    %766 = vmatpush.bf16.msra.mxu0 %v384
    %767 = vmatpush.bf16.msra.mxu0 %v383
    %768 = vmatpush.bf16.msra.mxu0 %v382
    %769 = vmatpush.bf16.msra.mxu0 %v381
    %770 = vmatpush.bf16.msra.mxu0 %v380
    %771 = vmatpush.bf16.msra.mxu0 %v379
    %772 = vmatpush.bf16.msra.mxu0 %v378
    %773 = vmatpush.bf16.msra.mxu0 %v377
    %774 = vmatmul.bf16.gmra.mxu0 %v697
    %v775 = vpop.f32.mrf.mxu0
    %v776 = vadd.f32 0.0, %v775
    %v777 = vpop.f32.mrf.mxu0
    %v778 = vadd.f32 0.0, %v777
    %779 = vdwg.mxu0
    %v780 = vadd.f32 %v764, %v776
    %v781 = vadd.f32 %v765, %v778
    %v782 = vmul.f32 %v717, 0.5
    %v783 = vmul.f32 %v718, 0.5
    %v784 = vtanh.pop %v782
    %v785 = vtanh.pop %v783
    %v786 = vmul.f32 %v784, 0.5
    %v787 = vmul.f32 %v785, 0.5
    %v788 = vadd.f32 %v786, 0.5
    %v789 = vadd.f32 %v787, 0.5
    %v790 = vmul.f32 %v738, 0.5
    %v791 = vmul.f32 %v739, 0.5
    %v792 = vtanh.pop %v790
    %v793 = vtanh.pop %v791
    %v794 = vmul.f32 %v792, 0.5
    %v795 = vmul.f32 %v793, 0.5
    %v796 = vadd.f32 %v794, 0.5
    %v797 = vadd.f32 %v795, 0.5
    %v798 = vtanh.pop %v759
    %v799 = vtanh.pop %v760
    %v800 = vmul.f32 %v780, 0.5
    %v801 = vmul.f32 %v781, 0.5
    %v802 = vtanh.pop %v800
    %v803 = vtanh.pop %v801
    %v804 = vmul.f32 %v802, 0.5
    %v805 = vmul.f32 %v803, 0.5
    %v806 = vadd.f32 %v804, 0.5
    %v807 = vadd.f32 %v805, 0.5
    %v808 = vmul.f32 %v796, %v647
    %v809 = vmul.f32 %v797, %v648
    %v810 = vmul.f32 %v788, %v798
    %v811 = vmul.f32 %v789, %v799
    %v812 = vadd.f32 %v808, %v810
    %v813 = vadd.f32 %v809, %v811
    %v814 = vtanh.pop %v812
    %v815 = vtanh.pop %v813
    %v816 = vmul.f32 %v806, %v814
    %v817 = vmul.f32 %v807, %v815
    %s818 = sadd.s32 %s132, 2
    %v819 = vstv %s818
    %vm820 = vcmp.gt.s32.totalorder %v63, %v819
    %vm821 = vcmp.gt.s32.totalorder %v64, %v819
    %v822 = vsel %vm820, 1, 0
    %v823 = vsel %vm821, 1, 0
    %824 = vset.pattern.permute.xlu0 0
    %825 = vperm.xlu0 %824, %v822
    %v826 = vpop.permute.xlu0 %825
    %827 = vset.pattern.permute.xlu0 0
    %828 = vperm.xlu0 %827, %v823
    %v829 = vpop.permute.xlu0 %828
    %vm830 = vcmp.eq.s32.totalorder %v826, 1
    %vm831 = vcmp.eq.s32.totalorder %v829, 1
    %v832 = vsel %vm830, %v816, %v645
    %v833 = vsel %vm831, %v817, %v646
    %v834 = vsel %vm830, %v812, %v647
    %v835 = vsel %vm831, %v813, %v648
    %v836 = vsel %vm830, %v816, 0.0
    %v837 = vsel %vm831, %v817, 0.0
    %v840 = vrot.slane %v836, 1
    %v841 = vrot.slane %v836, 2
    %v842 = vrot.slane %v836, 3
    %v843 = vrot.slane %v836, 4
    %v844 = vrot.slane %v836, 5
    %v845 = vrot.slane %v836, 6
    %v846 = vrot.slane %v836, 7
    %v847 = vrot.slane %v837, 1
    %v848 = vrot.slane %v837, 2
    %v849 = vrot.slane %v837, 3
    %v850 = vrot.slane %v837, 4
    %v851 = vrot.slane %v837, 5
    %v852 = vrot.slane %v837, 6
    %v853 = vrot.slane %v837, 7
    %868 = vst [vmem:[#allocation7 + $0x2] sm:$0x1] %v836
    %869 = vst [vmem:[#allocation7 + $0xa] sm:$0x1] %v840
    %870 = vst [vmem:[#allocation7 + $0x12] sm:$0x1] %v841
    %871 = vst [vmem:[#allocation7 + $0x1a] sm:$0x1] %v842
    %872 = vst [vmem:[#allocation7 + $0x22] sm:$0x1] %v843
    %873 = vst [vmem:[#allocation7 + $0x2a] sm:$0x1] %v844
    %874 = vst [vmem:[#allocation7 + $0x32] sm:$0x1] %v845
    %875 = vst [vmem:[#allocation7 + $0x3a] sm:$0x1] %v846
    %876 = vst [vmem:[#allocation7 + $0x42] sm:$0x1] %v837
    %877 = vst [vmem:[#allocation7 + $0x4a] sm:$0x1] %v847
    %878 = vst [vmem:[#allocation7 + $0x52] sm:$0x1] %v848
    %879 = vst [vmem:[#allocation7 + $0x5a] sm:$0x1] %v849
    %880 = vst [vmem:[#allocation7 + $0x62] sm:$0x1] %v850
    %881 = vst [vmem:[#allocation7 + $0x6a] sm:$0x1] %v851
    %882 = vst [vmem:[#allocation7 + $0x72] sm:$0x1] %v852
    %883 = vst [vmem:[#allocation7 + $0x7a] sm:$0x1] %v853
    %v884 = vpack.c.bf16 %v833, %v832
    %s885 = scalar_lea.vmem [#allocation2], 96
    %v886 = vld [vmem:[%s885] sm:$0xf]
    %v887 = vld [vmem:[%s885 + $0x4] sm:$0xf]
    %v888 = vunpack.c.l.bf16 %v886
    %v889 = vunpack.c.l.bf16 %v887
    %890 = vmatpush.bf16.msra.mxu0 %v177
    %891 = vmatpush.bf16.msra.mxu0 %v176
    %892 = vmatpush.bf16.msra.mxu0 %v175
    %893 = vmatpush.bf16.msra.mxu0 %v174
    %894 = vmatpush.bf16.msra.mxu0 %v173
    %895 = vmatpush.bf16.msra.mxu0 %v172
    %896 = vmatpush.bf16.msra.mxu0 %v171
    %897 = vmatpush.bf16.msra.mxu0 %v170
    %898 = vmatmul.bf16.gmra.mxu0 %v884
    %v899 = vpop.f32.mrf.mxu0
    %v900 = vadd.f32 0.0, %v899
    %v901 = vpop.f32.mrf.mxu0
    %v902 = vadd.f32 0.0, %v901
    %903 = vdwg.mxu0
    %v904 = vadd.f32 %v888, %v900
    %v905 = vadd.f32 %v889, %v902
    %s906 = scalar_lea.vmem [#allocation2], 104
    %v907 = vld [vmem:[%s906] sm:$0xf]
    %v908 = vld [vmem:[%s906 + $0x4] sm:$0xf]
    %v909 = vunpack.c.l.bf16 %v907
    %v910 = vunpack.c.l.bf16 %v908
    %911 = vmatpush.bf16.msra.mxu0 %v246
    %912 = vmatpush.bf16.msra.mxu0 %v245
    %913 = vmatpush.bf16.msra.mxu0 %v244
    %914 = vmatpush.bf16.msra.mxu0 %v243
    %915 = vmatpush.bf16.msra.mxu0 %v242
    %916 = vmatpush.bf16.msra.mxu0 %v241
    %917 = vmatpush.bf16.msra.mxu0 %v240
    %918 = vmatpush.bf16.msra.mxu0 %v239
    %919 = vmatmul.bf16.gmra.mxu0 %v884
    %v920 = vpop.f32.mrf.mxu0
    %v921 = vadd.f32 0.0, %v920
    %v922 = vpop.f32.mrf.mxu0
    %v923 = vadd.f32 0.0, %v922
    %924 = vdwg.mxu0
    %v925 = vadd.f32 %v909, %v921
    %v926 = vadd.f32 %v910, %v923
    %s927 = scalar_lea.vmem [#allocation2], 112
    %v928 = vld [vmem:[%s927] sm:$0xf]
    %v929 = vld [vmem:[%s927 + $0x4] sm:$0xf]
    %v930 = vunpack.c.l.bf16 %v928
    %v931 = vunpack.c.l.bf16 %v929
    %932 = vmatpush.bf16.msra.mxu0 %v315
    %933 = vmatpush.bf16.msra.mxu0 %v314
    %934 = vmatpush.bf16.msra.mxu0 %v313
    %935 = vmatpush.bf16.msra.mxu0 %v312
    %936 = vmatpush.bf16.msra.mxu0 %v311
    %937 = vmatpush.bf16.msra.mxu0 %v310
    %938 = vmatpush.bf16.msra.mxu0 %v309
    %939 = vmatpush.bf16.msra.mxu0 %v308
    %940 = vmatmul.bf16.gmra.mxu0 %v884
    %v941 = vpop.f32.mrf.mxu0
    %v942 = vadd.f32 0.0, %v941
    %v943 = vpop.f32.mrf.mxu0
    %v944 = vadd.f32 0.0, %v943
    %945 = vdwg.mxu0
    %v946 = vadd.f32 %v930, %v942
    %v947 = vadd.f32 %v931, %v944
    %s948 = scalar_lea.vmem [#allocation2], 120
    %v949 = vld [vmem:[%s948] sm:$0xf]
    %v950 = vld [vmem:[%s948 + $0x4] sm:$0xf]
    %v951 = vunpack.c.l.bf16 %v949
    %v952 = vunpack.c.l.bf16 %v950
    %953 = vmatpush.bf16.msra.mxu0 %v384
    %954 = vmatpush.bf16.msra.mxu0 %v383
    %955 = vmatpush.bf16.msra.mxu0 %v382
    %956 = vmatpush.bf16.msra.mxu0 %v381
    %957 = vmatpush.bf16.msra.mxu0 %v380
    %958 = vmatpush.bf16.msra.mxu0 %v379
    %959 = vmatpush.bf16.msra.mxu0 %v378
    %960 = vmatpush.bf16.msra.mxu0 %v377
    %961 = vmatmul.bf16.gmra.mxu0 %v884
    %v962 = vpop.f32.mrf.mxu0
    %v963 = vadd.f32 0.0, %v962
    %v964 = vpop.f32.mrf.mxu0
    %v965 = vadd.f32 0.0, %v964
    %966 = vdwg.mxu0
    %v967 = vadd.f32 %v951, %v963
    %v968 = vadd.f32 %v952, %v965
    %v969 = vmul.f32 %v904, 0.5
    %v970 = vmul.f32 %v905, 0.5
    %v971 = vtanh.pop %v969
    %v972 = vtanh.pop %v970
    %v973 = vmul.f32 %v971, 0.5
    %v974 = vmul.f32 %v972, 0.5
    %v975 = vadd.f32 %v973, 0.5
    %v976 = vadd.f32 %v974, 0.5
    %v977 = vmul.f32 %v925, 0.5
    %v978 = vmul.f32 %v926, 0.5
    %v979 = vtanh.pop %v977
    %v980 = vtanh.pop %v978
    %v981 = vmul.f32 %v979, 0.5
    %v982 = vmul.f32 %v980, 0.5
    %v983 = vadd.f32 %v981, 0.5
    %v984 = vadd.f32 %v982, 0.5
    %v985 = vtanh.pop %v946
    %v986 = vtanh.pop %v947
    %v987 = vmul.f32 %v967, 0.5
    %v988 = vmul.f32 %v968, 0.5
    %v989 = vtanh.pop %v987
    %v990 = vtanh.pop %v988
    %v991 = vmul.f32 %v989, 0.5
    %v992 = vmul.f32 %v990, 0.5
    %v993 = vadd.f32 %v991, 0.5
    %v994 = vadd.f32 %v992, 0.5
    %v995 = vmul.f32 %v983, %v834
    %v996 = vmul.f32 %v984, %v835
    %v997 = vmul.f32 %v975, %v985
    %v998 = vmul.f32 %v976, %v986
    %v999 = vadd.f32 %v995, %v997
    %v1000 = vadd.f32 %v996, %v998
    %v1001 = vtanh.pop %v999
    %v1002 = vtanh.pop %v1000
    %v1003 = vmul.f32 %v993, %v1001
    %v1004 = vmul.f32 %v994, %v1002
    %s1005 = sadd.s32 %s132, 3
    %v1006 = vstv %s1005
    %vm1007 = vcmp.gt.s32.totalorder %v63, %v1006
    %vm1008 = vcmp.gt.s32.totalorder %v64, %v1006
    %v1009 = vsel %vm1007, 1, 0
    %v1010 = vsel %vm1008, 1, 0
    %1011 = vset.pattern.permute.xlu0 0
    %1012 = vperm.xlu0 %1011, %v1009
    %v1013 = vpop.permute.xlu0 %1012
    %1014 = vset.pattern.permute.xlu0 0
    %1015 = vperm.xlu0 %1014, %v1010
    %v1016 = vpop.permute.xlu0 %1015
    %vm1017 = vcmp.eq.s32.totalorder %v1013, 1
    %vm1018 = vcmp.eq.s32.totalorder %v1016, 1
    %v1019 = vsel %vm1017, %v1003, %v832
    %v1020 = vsel %vm1018, %v1004, %v833
    %v1021 = vsel %vm1017, %v999, %v834
    %v1022 = vsel %vm1018, %v1000, %v835
    %v1023 = vsel %vm1017, %v1003, 0.0
    %v1024 = vsel %vm1018, %v1004, 0.0
    %v1027 = vrot.slane %v1023, 1
    %v1028 = vrot.slane %v1023, 2
    %v1029 = vrot.slane %v1023, 3
    %v1030 = vrot.slane %v1023, 4
    %v1031 = vrot.slane %v1023, 5
    %v1032 = vrot.slane %v1023, 6
    %v1033 = vrot.slane %v1023, 7
    %v1034 = vrot.slane %v1024, 1
    %v1035 = vrot.slane %v1024, 2
    %v1036 = vrot.slane %v1024, 3
    %v1037 = vrot.slane %v1024, 4
    %v1038 = vrot.slane %v1024, 5
    %v1039 = vrot.slane %v1024, 6
    %v1040 = vrot.slane %v1024, 7
    %1055 = vst [vmem:[#allocation7 + $0x3] sm:$0x1] %v1023
    %1056 = vst [vmem:[#allocation7 + $0xb] sm:$0x1] %v1027
    %1057 = vst [vmem:[#allocation7 + $0x13] sm:$0x1] %v1028
    %1058 = vst [vmem:[#allocation7 + $0x1b] sm:$0x1] %v1029
    %1059 = vst [vmem:[#allocation7 + $0x23] sm:$0x1] %v1030
    %1060 = vst [vmem:[#allocation7 + $0x2b] sm:$0x1] %v1031
    %1061 = vst [vmem:[#allocation7 + $0x33] sm:$0x1] %v1032
    %1062 = vst [vmem:[#allocation7 + $0x3b] sm:$0x1] %v1033
    %1063 = vst [vmem:[#allocation7 + $0x43] sm:$0x1] %v1024
    %1064 = vst [vmem:[#allocation7 + $0x4b] sm:$0x1] %v1034
    %1065 = vst [vmem:[#allocation7 + $0x53] sm:$0x1] %v1035
    %1066 = vst [vmem:[#allocation7 + $0x5b] sm:$0x1] %v1036
    %1067 = vst [vmem:[#allocation7 + $0x63] sm:$0x1] %v1037
    %1068 = vst [vmem:[#allocation7 + $0x6b] sm:$0x1] %v1038
    %1069 = vst [vmem:[#allocation7 + $0x73] sm:$0x1] %v1039
    %1070 = vst [vmem:[#allocation7 + $0x7b] sm:$0x1] %v1040
    %v1071 = vpack.c.bf16 %v1020, %v1019
    %s1072 = scalar_lea.vmem [#allocation2], 128
    %v1073 = vld [vmem:[%s1072] sm:$0xf]
    %v1074 = vld [vmem:[%s1072 + $0x4] sm:$0xf]
    %v1075 = vunpack.c.l.bf16 %v1073
    %v1076 = vunpack.c.l.bf16 %v1074
    %1077 = vmatpush.bf16.msra.mxu0 %v177
    %1078 = vmatpush.bf16.msra.mxu0 %v176
    %1079 = vmatpush.bf16.msra.mxu0 %v175
    %1080 = vmatpush.bf16.msra.mxu0 %v174
    %1081 = vmatpush.bf16.msra.mxu0 %v173
    %1082 = vmatpush.bf16.msra.mxu0 %v172
    %1083 = vmatpush.bf16.msra.mxu0 %v171
    %1084 = vmatpush.bf16.msra.mxu0 %v170
    %1085 = vmatmul.bf16.gmra.mxu0 %v1071
    %v1086 = vpop.f32.mrf.mxu0
    %v1087 = vadd.f32 0.0, %v1086
    %v1088 = vpop.f32.mrf.mxu0
    %v1089 = vadd.f32 0.0, %v1088
    %1090 = vdwg.mxu0
    %v1091 = vadd.f32 %v1075, %v1087
    %v1092 = vadd.f32 %v1076, %v1089
    %s1093 = scalar_lea.vmem [#allocation2], 136
    %v1094 = vld [vmem:[%s1093] sm:$0xf]
    %v1095 = vld [vmem:[%s1093 + $0x4] sm:$0xf]
    %v1096 = vunpack.c.l.bf16 %v1094
    %v1097 = vunpack.c.l.bf16 %v1095
    %1098 = vmatpush.bf16.msra.mxu0 %v246
    %1099 = vmatpush.bf16.msra.mxu0 %v245
    %1100 = vmatpush.bf16.msra.mxu0 %v244
    %1101 = vmatpush.bf16.msra.mxu0 %v243
    %1102 = vmatpush.bf16.msra.mxu0 %v242
    %1103 = vmatpush.bf16.msra.mxu0 %v241
    %1104 = vmatpush.bf16.msra.mxu0 %v240
    %1105 = vmatpush.bf16.msra.mxu0 %v239
    %1106 = vmatmul.bf16.gmra.mxu0 %v1071
    %v1107 = vpop.f32.mrf.mxu0
    %v1108 = vadd.f32 0.0, %v1107
    %v1109 = vpop.f32.mrf.mxu0
    %v1110 = vadd.f32 0.0, %v1109
    %1111 = vdwg.mxu0
    %v1112 = vadd.f32 %v1096, %v1108
    %v1113 = vadd.f32 %v1097, %v1110
    %s1114 = scalar_lea.vmem [#allocation2], 144
    %v1115 = vld [vmem:[%s1114] sm:$0xf]
    %v1116 = vld [vmem:[%s1114 + $0x4] sm:$0xf]
    %v1117 = vunpack.c.l.bf16 %v1115
    %v1118 = vunpack.c.l.bf16 %v1116
    %1119 = vmatpush.bf16.msra.mxu0 %v315
    %1120 = vmatpush.bf16.msra.mxu0 %v314
    %1121 = vmatpush.bf16.msra.mxu0 %v313
    %1122 = vmatpush.bf16.msra.mxu0 %v312
    %1123 = vmatpush.bf16.msra.mxu0 %v311
    %1124 = vmatpush.bf16.msra.mxu0 %v310
    %1125 = vmatpush.bf16.msra.mxu0 %v309
    %1126 = vmatpush.bf16.msra.mxu0 %v308
    %1127 = vmatmul.bf16.gmra.mxu0 %v1071
    %v1128 = vpop.f32.mrf.mxu0
    %v1129 = vadd.f32 0.0, %v1128
    %v1130 = vpop.f32.mrf.mxu0
    %v1131 = vadd.f32 0.0, %v1130
    %1132 = vdwg.mxu0
    %v1133 = vadd.f32 %v1117, %v1129
    %v1134 = vadd.f32 %v1118, %v1131
    %s1135 = scalar_lea.vmem [#allocation2], 152
    %v1136 = vld [vmem:[%s1135] sm:$0xf]
    %v1137 = vld [vmem:[%s1135 + $0x4] sm:$0xf]
    %v1138 = vunpack.c.l.bf16 %v1136
    %v1139 = vunpack.c.l.bf16 %v1137
    %1140 = vmatpush.bf16.msra.mxu0 %v384
    %1141 = vmatpush.bf16.msra.mxu0 %v383
    %1142 = vmatpush.bf16.msra.mxu0 %v382
    %1143 = vmatpush.bf16.msra.mxu0 %v381
    %1144 = vmatpush.bf16.msra.mxu0 %v380
    %1145 = vmatpush.bf16.msra.mxu0 %v379
    %1146 = vmatpush.bf16.msra.mxu0 %v378
    %1147 = vmatpush.bf16.msra.mxu0 %v377
    %1148 = vmatmul.bf16.gmra.mxu0 %v1071
    %v1149 = vpop.f32.mrf.mxu0
    %v1150 = vadd.f32 0.0, %v1149
    %v1151 = vpop.f32.mrf.mxu0
    %v1152 = vadd.f32 0.0, %v1151
    %1153 = vdwg.mxu0
    %v1154 = vadd.f32 %v1138, %v1150
    %v1155 = vadd.f32 %v1139, %v1152
    %v1156 = vmul.f32 %v1091, 0.5
    %v1157 = vmul.f32 %v1092, 0.5
    %v1158 = vtanh.pop %v1156
    %v1159 = vtanh.pop %v1157
    %v1160 = vmul.f32 %v1158, 0.5
    %v1161 = vmul.f32 %v1159, 0.5
    %v1162 = vadd.f32 %v1160, 0.5
    %v1163 = vadd.f32 %v1161, 0.5
    %v1164 = vmul.f32 %v1112, 0.5
    %v1165 = vmul.f32 %v1113, 0.5
    %v1166 = vtanh.pop %v1164
    %v1167 = vtanh.pop %v1165
    %v1168 = vmul.f32 %v1166, 0.5
    %v1169 = vmul.f32 %v1167, 0.5
    %v1170 = vadd.f32 %v1168, 0.5
    %v1171 = vadd.f32 %v1169, 0.5
    %v1172 = vtanh.pop %v1133
    %v1173 = vtanh.pop %v1134
    %v1174 = vmul.f32 %v1154, 0.5
    %v1175 = vmul.f32 %v1155, 0.5
    %v1176 = vtanh.pop %v1174
    %v1177 = vtanh.pop %v1175
    %v1178 = vmul.f32 %v1176, 0.5
    %v1179 = vmul.f32 %v1177, 0.5
    %v1180 = vadd.f32 %v1178, 0.5
    %v1181 = vadd.f32 %v1179, 0.5
    %v1182 = vmul.f32 %v1170, %v1021
    %v1183 = vmul.f32 %v1171, %v1022
    %v1184 = vmul.f32 %v1162, %v1172
    %v1185 = vmul.f32 %v1163, %v1173
    %v1186 = vadd.f32 %v1182, %v1184
    %v1187 = vadd.f32 %v1183, %v1185
    %v1188 = vtanh.pop %v1186
    %v1189 = vtanh.pop %v1187
    %v1190 = vmul.f32 %v1180, %v1188
    %v1191 = vmul.f32 %v1181, %v1189
    %s1192 = sadd.s32 %s132, 4
    %v1193 = vstv %s1192
    %vm1194 = vcmp.gt.s32.totalorder %v63, %v1193
    %vm1195 = vcmp.gt.s32.totalorder %v64, %v1193
    %v1196 = vsel %vm1194, 1, 0
    %v1197 = vsel %vm1195, 1, 0
    %1198 = vset.pattern.permute.xlu0 0
    %1199 = vperm.xlu0 %1198, %v1196
    %v1200 = vpop.permute.xlu0 %1199
    %1201 = vset.pattern.permute.xlu0 0
    %1202 = vperm.xlu0 %1201, %v1197
    %v1203 = vpop.permute.xlu0 %1202
    %vm1204 = vcmp.eq.s32.totalorder %v1200, 1
    %vm1205 = vcmp.eq.s32.totalorder %v1203, 1
    %v1206 = vsel %vm1204, %v1190, %v1019
    %v1207 = vsel %vm1205, %v1191, %v1020
    %v1208 = vsel %vm1204, %v1186, %v1021
    %v1209 = vsel %vm1205, %v1187, %v1022
    %v1210 = vsel %vm1204, %v1190, 0.0
    %v1211 = vsel %vm1205, %v1191, 0.0
    %v1214 = vrot.slane %v1210, 1
    %v1215 = vrot.slane %v1210, 2
    %v1216 = vrot.slane %v1210, 3
    %v1217 = vrot.slane %v1210, 4
    %v1218 = vrot.slane %v1210, 5
    %v1219 = vrot.slane %v1210, 6
    %v1220 = vrot.slane %v1210, 7
    %v1221 = vrot.slane %v1211, 1
    %v1222 = vrot.slane %v1211, 2
    %v1223 = vrot.slane %v1211, 3
    %v1224 = vrot.slane %v1211, 4
    %v1225 = vrot.slane %v1211, 5
    %v1226 = vrot.slane %v1211, 6
    %v1227 = vrot.slane %v1211, 7
    %1242 = vst [vmem:[#allocation7 + $0x4] sm:$0x1] %v1210
    %1243 = vst [vmem:[#allocation7 + $0xc] sm:$0x1] %v1214
    %1244 = vst [vmem:[#allocation7 + $0x14] sm:$0x1] %v1215
    %1245 = vst [vmem:[#allocation7 + $0x1c] sm:$0x1] %v1216
    %1246 = vst [vmem:[#allocation7 + $0x24] sm:$0x1] %v1217
    %1247 = vst [vmem:[#allocation7 + $0x2c] sm:$0x1] %v1218
    %1248 = vst [vmem:[#allocation7 + $0x34] sm:$0x1] %v1219
    %1249 = vst [vmem:[#allocation7 + $0x3c] sm:$0x1] %v1220
    %1250 = vst [vmem:[#allocation7 + $0x44] sm:$0x1] %v1211
    %1251 = vst [vmem:[#allocation7 + $0x4c] sm:$0x1] %v1221
    %1252 = vst [vmem:[#allocation7 + $0x54] sm:$0x1] %v1222
    %1253 = vst [vmem:[#allocation7 + $0x5c] sm:$0x1] %v1223
    %1254 = vst [vmem:[#allocation7 + $0x64] sm:$0x1] %v1224
    %1255 = vst [vmem:[#allocation7 + $0x6c] sm:$0x1] %v1225
    %1256 = vst [vmem:[#allocation7 + $0x74] sm:$0x1] %v1226
    %1257 = vst [vmem:[#allocation7 + $0x7c] sm:$0x1] %v1227
    %v1258 = vpack.c.bf16 %v1207, %v1206
    %s1259 = scalar_lea.vmem [#allocation2], 160
    %v1260 = vld [vmem:[%s1259] sm:$0xf]
    %v1261 = vld [vmem:[%s1259 + $0x4] sm:$0xf]
    %v1262 = vunpack.c.l.bf16 %v1260
    %v1263 = vunpack.c.l.bf16 %v1261
    %1264 = vmatpush.bf16.msra.mxu0 %v177
    %1265 = vmatpush.bf16.msra.mxu0 %v176
    %1266 = vmatpush.bf16.msra.mxu0 %v175
    %1267 = vmatpush.bf16.msra.mxu0 %v174
    %1268 = vmatpush.bf16.msra.mxu0 %v173
    %1269 = vmatpush.bf16.msra.mxu0 %v172
    %1270 = vmatpush.bf16.msra.mxu0 %v171
    %1271 = vmatpush.bf16.msra.mxu0 %v170
    %1272 = vmatmul.bf16.gmra.mxu0 %v1258
    %v1273 = vpop.f32.mrf.mxu0
    %v1274 = vadd.f32 0.0, %v1273
    %v1275 = vpop.f32.mrf.mxu0
    %v1276 = vadd.f32 0.0, %v1275
    %1277 = vdwg.mxu0
    %v1278 = vadd.f32 %v1262, %v1274
    %v1279 = vadd.f32 %v1263, %v1276
    %s1280 = scalar_lea.vmem [#allocation2], 168
    %v1281 = vld [vmem:[%s1280] sm:$0xf]
    %v1282 = vld [vmem:[%s1280 + $0x4] sm:$0xf]
    %v1283 = vunpack.c.l.bf16 %v1281
    %v1284 = vunpack.c.l.bf16 %v1282
    %1285 = vmatpush.bf16.msra.mxu0 %v246
    %1286 = vmatpush.bf16.msra.mxu0 %v245
    %1287 = vmatpush.bf16.msra.mxu0 %v244
    %1288 = vmatpush.bf16.msra.mxu0 %v243
    %1289 = vmatpush.bf16.msra.mxu0 %v242
    %1290 = vmatpush.bf16.msra.mxu0 %v241
    %1291 = vmatpush.bf16.msra.mxu0 %v240
    %1292 = vmatpush.bf16.msra.mxu0 %v239
    %1293 = vmatmul.bf16.gmra.mxu0 %v1258
    %v1294 = vpop.f32.mrf.mxu0
    %v1295 = vadd.f32 0.0, %v1294
    %v1296 = vpop.f32.mrf.mxu0
    %v1297 = vadd.f32 0.0, %v1296
    %1298 = vdwg.mxu0
    %v1299 = vadd.f32 %v1283, %v1295
    %v1300 = vadd.f32 %v1284, %v1297
    %s1301 = scalar_lea.vmem [#allocation2], 176
    %v1302 = vld [vmem:[%s1301] sm:$0xf]
    %v1303 = vld [vmem:[%s1301 + $0x4] sm:$0xf]
    %v1304 = vunpack.c.l.bf16 %v1302
    %v1305 = vunpack.c.l.bf16 %v1303
    %1306 = vmatpush.bf16.msra.mxu0 %v315
    %1307 = vmatpush.bf16.msra.mxu0 %v314
    %1308 = vmatpush.bf16.msra.mxu0 %v313
    %1309 = vmatpush.bf16.msra.mxu0 %v312
    %1310 = vmatpush.bf16.msra.mxu0 %v311
    %1311 = vmatpush.bf16.msra.mxu0 %v310
    %1312 = vmatpush.bf16.msra.mxu0 %v309
    %1313 = vmatpush.bf16.msra.mxu0 %v308
    %1314 = vmatmul.bf16.gmra.mxu0 %v1258
    %v1315 = vpop.f32.mrf.mxu0
    %v1316 = vadd.f32 0.0, %v1315
    %v1317 = vpop.f32.mrf.mxu0
    %v1318 = vadd.f32 0.0, %v1317
    %1319 = vdwg.mxu0
    %v1320 = vadd.f32 %v1304, %v1316
    %v1321 = vadd.f32 %v1305, %v1318
    %s1322 = scalar_lea.vmem [#allocation2], 184
    %v1323 = vld [vmem:[%s1322] sm:$0xf]
    %v1324 = vld [vmem:[%s1322 + $0x4] sm:$0xf]
    %v1325 = vunpack.c.l.bf16 %v1323
    %v1326 = vunpack.c.l.bf16 %v1324
    %1327 = vmatpush.bf16.msra.mxu0 %v384
    %1328 = vmatpush.bf16.msra.mxu0 %v383
    %1329 = vmatpush.bf16.msra.mxu0 %v382
    %1330 = vmatpush.bf16.msra.mxu0 %v381
    %1331 = vmatpush.bf16.msra.mxu0 %v380
    %1332 = vmatpush.bf16.msra.mxu0 %v379
    %1333 = vmatpush.bf16.msra.mxu0 %v378
    %1334 = vmatpush.bf16.msra.mxu0 %v377
    %1335 = vmatmul.bf16.gmra.mxu0 %v1258
    %v1336 = vpop.f32.mrf.mxu0
    %v1337 = vadd.f32 0.0, %v1336
    %v1338 = vpop.f32.mrf.mxu0
    %v1339 = vadd.f32 0.0, %v1338
    %1340 = vdwg.mxu0
    %v1341 = vadd.f32 %v1325, %v1337
    %v1342 = vadd.f32 %v1326, %v1339
    %v1343 = vmul.f32 %v1278, 0.5
    %v1344 = vmul.f32 %v1279, 0.5
    %v1345 = vtanh.pop %v1343
    %v1346 = vtanh.pop %v1344
    %v1347 = vmul.f32 %v1345, 0.5
    %v1348 = vmul.f32 %v1346, 0.5
    %v1349 = vadd.f32 %v1347, 0.5
    %v1350 = vadd.f32 %v1348, 0.5
    %v1351 = vmul.f32 %v1299, 0.5
    %v1352 = vmul.f32 %v1300, 0.5
    %v1353 = vtanh.pop %v1351
    %v1354 = vtanh.pop %v1352
    %v1355 = vmul.f32 %v1353, 0.5
    %v1356 = vmul.f32 %v1354, 0.5
    %v1357 = vadd.f32 %v1355, 0.5
    %v1358 = vadd.f32 %v1356, 0.5
    %v1359 = vtanh.pop %v1320
    %v1360 = vtanh.pop %v1321
    %v1361 = vmul.f32 %v1341, 0.5
    %v1362 = vmul.f32 %v1342, 0.5
    %v1363 = vtanh.pop %v1361
    %v1364 = vtanh.pop %v1362
    %v1365 = vmul.f32 %v1363, 0.5
    %v1366 = vmul.f32 %v1364, 0.5
    %v1367 = vadd.f32 %v1365, 0.5
    %v1368 = vadd.f32 %v1366, 0.5
    %v1369 = vmul.f32 %v1357, %v1208
    %v1370 = vmul.f32 %v1358, %v1209
    %v1371 = vmul.f32 %v1349, %v1359
    %v1372 = vmul.f32 %v1350, %v1360
    %v1373 = vadd.f32 %v1369, %v1371
    %v1374 = vadd.f32 %v1370, %v1372
    %v1375 = vtanh.pop %v1373
    %v1376 = vtanh.pop %v1374
    %v1377 = vmul.f32 %v1367, %v1375
    %v1378 = vmul.f32 %v1368, %v1376
    %s1379 = sadd.s32 %s132, 5
    %v1380 = vstv %s1379
    %vm1381 = vcmp.gt.s32.totalorder %v63, %v1380
    %vm1382 = vcmp.gt.s32.totalorder %v64, %v1380
    %v1383 = vsel %vm1381, 1, 0
    %v1384 = vsel %vm1382, 1, 0
    %1385 = vset.pattern.permute.xlu0 0
    %1386 = vperm.xlu0 %1385, %v1383
    %v1387 = vpop.permute.xlu0 %1386
    %1388 = vset.pattern.permute.xlu0 0
    %1389 = vperm.xlu0 %1388, %v1384
    %v1390 = vpop.permute.xlu0 %1389
    %vm1391 = vcmp.eq.s32.totalorder %v1387, 1
    %vm1392 = vcmp.eq.s32.totalorder %v1390, 1
    %v1393 = vsel %vm1391, %v1377, %v1206
    %v1394 = vsel %vm1392, %v1378, %v1207
    %v1395 = vsel %vm1391, %v1373, %v1208
    %v1396 = vsel %vm1392, %v1374, %v1209
    %v1397 = vsel %vm1391, %v1377, 0.0
    %v1398 = vsel %vm1392, %v1378, 0.0
    %v1401 = vrot.slane %v1397, 1
    %v1402 = vrot.slane %v1397, 2
    %v1403 = vrot.slane %v1397, 3
    %v1404 = vrot.slane %v1397, 4
    %v1405 = vrot.slane %v1397, 5
    %v1406 = vrot.slane %v1397, 6
    %v1407 = vrot.slane %v1397, 7
    %v1408 = vrot.slane %v1398, 1
    %v1409 = vrot.slane %v1398, 2
    %v1410 = vrot.slane %v1398, 3
    %v1411 = vrot.slane %v1398, 4
    %v1412 = vrot.slane %v1398, 5
    %v1413 = vrot.slane %v1398, 6
    %v1414 = vrot.slane %v1398, 7
    %1429 = vst [vmem:[#allocation7 + $0x5] sm:$0x1] %v1397
    %1430 = vst [vmem:[#allocation7 + $0xd] sm:$0x1] %v1401
    %1431 = vst [vmem:[#allocation7 + $0x15] sm:$0x1] %v1402
    %1432 = vst [vmem:[#allocation7 + $0x1d] sm:$0x1] %v1403
    %1433 = vst [vmem:[#allocation7 + $0x25] sm:$0x1] %v1404
    %1434 = vst [vmem:[#allocation7 + $0x2d] sm:$0x1] %v1405
    %1435 = vst [vmem:[#allocation7 + $0x35] sm:$0x1] %v1406
    %1436 = vst [vmem:[#allocation7 + $0x3d] sm:$0x1] %v1407
    %1437 = vst [vmem:[#allocation7 + $0x45] sm:$0x1] %v1398
    %1438 = vst [vmem:[#allocation7 + $0x4d] sm:$0x1] %v1408
    %1439 = vst [vmem:[#allocation7 + $0x55] sm:$0x1] %v1409
    %1440 = vst [vmem:[#allocation7 + $0x5d] sm:$0x1] %v1410
    %1441 = vst [vmem:[#allocation7 + $0x65] sm:$0x1] %v1411
    %1442 = vst [vmem:[#allocation7 + $0x6d] sm:$0x1] %v1412
    %1443 = vst [vmem:[#allocation7 + $0x75] sm:$0x1] %v1413
    %1444 = vst [vmem:[#allocation7 + $0x7d] sm:$0x1] %v1414
    %v1445 = vpack.c.bf16 %v1394, %v1393
    %s1446 = scalar_lea.vmem [#allocation2], 192
    %v1447 = vld [vmem:[%s1446] sm:$0xf]
    %v1448 = vld [vmem:[%s1446 + $0x4] sm:$0xf]
    %v1449 = vunpack.c.l.bf16 %v1447
    %v1450 = vunpack.c.l.bf16 %v1448
    %1451 = vmatpush.bf16.msra.mxu0 %v177
    %1452 = vmatpush.bf16.msra.mxu0 %v176
    %1453 = vmatpush.bf16.msra.mxu0 %v175
    %1454 = vmatpush.bf16.msra.mxu0 %v174
    %1455 = vmatpush.bf16.msra.mxu0 %v173
    %1456 = vmatpush.bf16.msra.mxu0 %v172
    %1457 = vmatpush.bf16.msra.mxu0 %v171
    %1458 = vmatpush.bf16.msra.mxu0 %v170
    %1459 = vmatmul.bf16.gmra.mxu0 %v1445
    %v1460 = vpop.f32.mrf.mxu0
    %v1461 = vadd.f32 0.0, %v1460
    %v1462 = vpop.f32.mrf.mxu0
    %v1463 = vadd.f32 0.0, %v1462
    %1464 = vdwg.mxu0
    %v1465 = vadd.f32 %v1449, %v1461
    %v1466 = vadd.f32 %v1450, %v1463
    %s1467 = scalar_lea.vmem [#allocation2], 200
    %v1468 = vld [vmem:[%s1467] sm:$0xf]
    %v1469 = vld [vmem:[%s1467 + $0x4] sm:$0xf]
    %v1470 = vunpack.c.l.bf16 %v1468
    %v1471 = vunpack.c.l.bf16 %v1469
    %1472 = vmatpush.bf16.msra.mxu0 %v246
    %1473 = vmatpush.bf16.msra.mxu0 %v245
    %1474 = vmatpush.bf16.msra.mxu0 %v244
    %1475 = vmatpush.bf16.msra.mxu0 %v243
    %1476 = vmatpush.bf16.msra.mxu0 %v242
    %1477 = vmatpush.bf16.msra.mxu0 %v241
    %1478 = vmatpush.bf16.msra.mxu0 %v240
    %1479 = vmatpush.bf16.msra.mxu0 %v239
    %1480 = vmatmul.bf16.gmra.mxu0 %v1445
    %v1481 = vpop.f32.mrf.mxu0
    %v1482 = vadd.f32 0.0, %v1481
    %v1483 = vpop.f32.mrf.mxu0
    %v1484 = vadd.f32 0.0, %v1483
    %1485 = vdwg.mxu0
    %v1486 = vadd.f32 %v1470, %v1482
    %v1487 = vadd.f32 %v1471, %v1484
    %s1488 = scalar_lea.vmem [#allocation2], 208
    %v1489 = vld [vmem:[%s1488] sm:$0xf]
    %v1490 = vld [vmem:[%s1488 + $0x4] sm:$0xf]
    %v1491 = vunpack.c.l.bf16 %v1489
    %v1492 = vunpack.c.l.bf16 %v1490
    %1493 = vmatpush.bf16.msra.mxu0 %v315
    %1494 = vmatpush.bf16.msra.mxu0 %v314
    %1495 = vmatpush.bf16.msra.mxu0 %v313
    %1496 = vmatpush.bf16.msra.mxu0 %v312
    %1497 = vmatpush.bf16.msra.mxu0 %v311
    %1498 = vmatpush.bf16.msra.mxu0 %v310
    %1499 = vmatpush.bf16.msra.mxu0 %v309
    %1500 = vmatpush.bf16.msra.mxu0 %v308
    %1501 = vmatmul.bf16.gmra.mxu0 %v1445
    %v1502 = vpop.f32.mrf.mxu0
    %v1503 = vadd.f32 0.0, %v1502
    %v1504 = vpop.f32.mrf.mxu0
    %v1505 = vadd.f32 0.0, %v1504
    %1506 = vdwg.mxu0
    %v1507 = vadd.f32 %v1491, %v1503
    %v1508 = vadd.f32 %v1492, %v1505
    %s1509 = scalar_lea.vmem [#allocation2], 216
    %v1510 = vld [vmem:[%s1509] sm:$0xf]
    %v1511 = vld [vmem:[%s1509 + $0x4] sm:$0xf]
    %v1512 = vunpack.c.l.bf16 %v1510
    %v1513 = vunpack.c.l.bf16 %v1511
    %1514 = vmatpush.bf16.msra.mxu0 %v384
    %1515 = vmatpush.bf16.msra.mxu0 %v383
    %1516 = vmatpush.bf16.msra.mxu0 %v382
    %1517 = vmatpush.bf16.msra.mxu0 %v381
    %1518 = vmatpush.bf16.msra.mxu0 %v380
    %1519 = vmatpush.bf16.msra.mxu0 %v379
    %1520 = vmatpush.bf16.msra.mxu0 %v378
    %1521 = vmatpush.bf16.msra.mxu0 %v377
    %1522 = vmatmul.bf16.gmra.mxu0 %v1445
    %v1523 = vpop.f32.mrf.mxu0
    %v1524 = vadd.f32 0.0, %v1523
    %v1525 = vpop.f32.mrf.mxu0
    %v1526 = vadd.f32 0.0, %v1525
    %1527 = vdwg.mxu0
    %v1528 = vadd.f32 %v1512, %v1524
    %v1529 = vadd.f32 %v1513, %v1526
    %v1530 = vmul.f32 %v1465, 0.5
    %v1531 = vmul.f32 %v1466, 0.5
    %v1532 = vtanh.pop %v1530
    %v1533 = vtanh.pop %v1531
    %v1534 = vmul.f32 %v1532, 0.5
    %v1535 = vmul.f32 %v1533, 0.5
    %v1536 = vadd.f32 %v1534, 0.5
    %v1537 = vadd.f32 %v1535, 0.5
    %v1538 = vmul.f32 %v1486, 0.5
    %v1539 = vmul.f32 %v1487, 0.5
    %v1540 = vtanh.pop %v1538
    %v1541 = vtanh.pop %v1539
    %v1542 = vmul.f32 %v1540, 0.5
    %v1543 = vmul.f32 %v1541, 0.5
    %v1544 = vadd.f32 %v1542, 0.5
    %v1545 = vadd.f32 %v1543, 0.5
    %v1546 = vtanh.pop %v1507
    %v1547 = vtanh.pop %v1508
    %v1548 = vmul.f32 %v1528, 0.5
    %v1549 = vmul.f32 %v1529, 0.5
    %v1550 = vtanh.pop %v1548
    %v1551 = vtanh.pop %v1549
    %v1552 = vmul.f32 %v1550, 0.5
    %v1553 = vmul.f32 %v1551, 0.5
    %v1554 = vadd.f32 %v1552, 0.5
    %v1555 = vadd.f32 %v1553, 0.5
    %v1556 = vmul.f32 %v1544, %v1395
    %v1557 = vmul.f32 %v1545, %v1396
    %v1558 = vmul.f32 %v1536, %v1546
    %v1559 = vmul.f32 %v1537, %v1547
    %v1560 = vadd.f32 %v1556, %v1558
    %v1561 = vadd.f32 %v1557, %v1559
    %v1562 = vtanh.pop %v1560
    %v1563 = vtanh.pop %v1561
    %v1564 = vmul.f32 %v1554, %v1562
    %v1565 = vmul.f32 %v1555, %v1563
    %s1566 = sadd.s32 %s132, 6
    %v1567 = vstv %s1566
    %vm1568 = vcmp.gt.s32.totalorder %v63, %v1567
    %vm1569 = vcmp.gt.s32.totalorder %v64, %v1567
    %v1570 = vsel %vm1568, 1, 0
    %v1571 = vsel %vm1569, 1, 0
    %1572 = vset.pattern.permute.xlu0 0
    %1573 = vperm.xlu0 %1572, %v1570
    %v1574 = vpop.permute.xlu0 %1573
    %1575 = vset.pattern.permute.xlu0 0
    %1576 = vperm.xlu0 %1575, %v1571
    %v1577 = vpop.permute.xlu0 %1576
    %vm1578 = vcmp.eq.s32.totalorder %v1574, 1
    %vm1579 = vcmp.eq.s32.totalorder %v1577, 1
    %v1580 = vsel %vm1578, %v1564, %v1393
    %v1581 = vsel %vm1579, %v1565, %v1394
    %v1582 = vsel %vm1578, %v1560, %v1395
    %v1583 = vsel %vm1579, %v1561, %v1396
    %v1584 = vsel %vm1578, %v1564, 0.0
    %v1585 = vsel %vm1579, %v1565, 0.0
    %v1588 = vrot.slane %v1584, 1
    %v1589 = vrot.slane %v1584, 2
    %v1590 = vrot.slane %v1584, 3
    %v1591 = vrot.slane %v1584, 4
    %v1592 = vrot.slane %v1584, 5
    %v1593 = vrot.slane %v1584, 6
    %v1594 = vrot.slane %v1584, 7
    %v1595 = vrot.slane %v1585, 1
    %v1596 = vrot.slane %v1585, 2
    %v1597 = vrot.slane %v1585, 3
    %v1598 = vrot.slane %v1585, 4
    %v1599 = vrot.slane %v1585, 5
    %v1600 = vrot.slane %v1585, 6
    %v1601 = vrot.slane %v1585, 7
    %1616 = vst [vmem:[#allocation7 + $0x6] sm:$0x1] %v1584
    %1617 = vst [vmem:[#allocation7 + $0xe] sm:$0x1] %v1588
    %1618 = vst [vmem:[#allocation7 + $0x16] sm:$0x1] %v1589
    %1619 = vst [vmem:[#allocation7 + $0x1e] sm:$0x1] %v1590
    %1620 = vst [vmem:[#allocation7 + $0x26] sm:$0x1] %v1591
    %1621 = vst [vmem:[#allocation7 + $0x2e] sm:$0x1] %v1592
    %1622 = vst [vmem:[#allocation7 + $0x36] sm:$0x1] %v1593
    %1623 = vst [vmem:[#allocation7 + $0x3e] sm:$0x1] %v1594
    %1624 = vst [vmem:[#allocation7 + $0x46] sm:$0x1] %v1585
    %1625 = vst [vmem:[#allocation7 + $0x4e] sm:$0x1] %v1595
    %1626 = vst [vmem:[#allocation7 + $0x56] sm:$0x1] %v1596
    %1627 = vst [vmem:[#allocation7 + $0x5e] sm:$0x1] %v1597
    %1628 = vst [vmem:[#allocation7 + $0x66] sm:$0x1] %v1598
    %1629 = vst [vmem:[#allocation7 + $0x6e] sm:$0x1] %v1599
    %1630 = vst [vmem:[#allocation7 + $0x76] sm:$0x1] %v1600
    %1631 = vst [vmem:[#allocation7 + $0x7e] sm:$0x1] %v1601
    %v1632 = vpack.c.bf16 %v1581, %v1580
    %s1633 = scalar_lea.vmem [#allocation2], 224
    %v1634 = vld [vmem:[%s1633] sm:$0xf]
    %v1635 = vld [vmem:[%s1633 + $0x4] sm:$0xf]
    %v1636 = vunpack.c.l.bf16 %v1634
    %v1637 = vunpack.c.l.bf16 %v1635
    %1638 = vmatpush.bf16.msra.mxu0 %v177
    %1639 = vmatpush.bf16.msra.mxu0 %v176
    %1640 = vmatpush.bf16.msra.mxu0 %v175
    %1641 = vmatpush.bf16.msra.mxu0 %v174
    %1642 = vmatpush.bf16.msra.mxu0 %v173
    %1643 = vmatpush.bf16.msra.mxu0 %v172
    %1644 = vmatpush.bf16.msra.mxu0 %v171
    %1645 = vmatpush.bf16.msra.mxu0 %v170
    %1646 = vmatmul.bf16.gmra.mxu0 %v1632
    %v1647 = vpop.f32.mrf.mxu0
    %v1648 = vadd.f32 0.0, %v1647
    %v1649 = vpop.f32.mrf.mxu0
    %v1650 = vadd.f32 0.0, %v1649
    %1651 = vdwg.mxu0
    %v1652 = vadd.f32 %v1636, %v1648
    %v1653 = vadd.f32 %v1637, %v1650
    %s1654 = scalar_lea.vmem [#allocation2], 232
    %v1655 = vld [vmem:[%s1654] sm:$0xf]
    %v1656 = vld [vmem:[%s1654 + $0x4] sm:$0xf]
    %v1657 = vunpack.c.l.bf16 %v1655
    %v1658 = vunpack.c.l.bf16 %v1656
    %1659 = vmatpush.bf16.msra.mxu0 %v246
    %1660 = vmatpush.bf16.msra.mxu0 %v245
    %1661 = vmatpush.bf16.msra.mxu0 %v244
    %1662 = vmatpush.bf16.msra.mxu0 %v243
    %1663 = vmatpush.bf16.msra.mxu0 %v242
    %1664 = vmatpush.bf16.msra.mxu0 %v241
    %1665 = vmatpush.bf16.msra.mxu0 %v240
    %1666 = vmatpush.bf16.msra.mxu0 %v239
    %1667 = vmatmul.bf16.gmra.mxu0 %v1632
    %v1668 = vpop.f32.mrf.mxu0
    %v1669 = vadd.f32 0.0, %v1668
    %v1670 = vpop.f32.mrf.mxu0
    %v1671 = vadd.f32 0.0, %v1670
    %1672 = vdwg.mxu0
    %v1673 = vadd.f32 %v1657, %v1669
    %v1674 = vadd.f32 %v1658, %v1671
    %s1675 = scalar_lea.vmem [#allocation2], 240
    %v1676 = vld [vmem:[%s1675] sm:$0xf]
    %v1677 = vld [vmem:[%s1675 + $0x4] sm:$0xf]
    %v1678 = vunpack.c.l.bf16 %v1676
    %v1679 = vunpack.c.l.bf16 %v1677
    %1680 = vmatpush.bf16.msra.mxu0 %v315
    %1681 = vmatpush.bf16.msra.mxu0 %v314
    %1682 = vmatpush.bf16.msra.mxu0 %v313
    %1683 = vmatpush.bf16.msra.mxu0 %v312
    %1684 = vmatpush.bf16.msra.mxu0 %v311
    %1685 = vmatpush.bf16.msra.mxu0 %v310
    %1686 = vmatpush.bf16.msra.mxu0 %v309
    %1687 = vmatpush.bf16.msra.mxu0 %v308
    %1688 = vmatmul.bf16.gmra.mxu0 %v1632
    %v1689 = vpop.f32.mrf.mxu0
    %v1690 = vadd.f32 0.0, %v1689
    %v1691 = vpop.f32.mrf.mxu0
    %v1692 = vadd.f32 0.0, %v1691
    %1693 = vdwg.mxu0
    %v1694 = vadd.f32 %v1678, %v1690
    %v1695 = vadd.f32 %v1679, %v1692
    %s1696 = scalar_lea.vmem [#allocation2], 248
    %v1697 = vld [vmem:[%s1696] sm:$0xf]
    %v1698 = vld [vmem:[%s1696 + $0x4] sm:$0xf]
    %v1699 = vunpack.c.l.bf16 %v1697
    %v1700 = vunpack.c.l.bf16 %v1698
    %1701 = vmatpush.bf16.msra.mxu0 %v384
    %1702 = vmatpush.bf16.msra.mxu0 %v383
    %1703 = vmatpush.bf16.msra.mxu0 %v382
    %1704 = vmatpush.bf16.msra.mxu0 %v381
    %1705 = vmatpush.bf16.msra.mxu0 %v380
    %1706 = vmatpush.bf16.msra.mxu0 %v379
    %1707 = vmatpush.bf16.msra.mxu0 %v378
    %1708 = vmatpush.bf16.msra.mxu0 %v377
    %1709 = vmatmul.bf16.gmra.mxu0 %v1632
    %v1710 = vpop.f32.mrf.mxu0
    %v1711 = vadd.f32 0.0, %v1710
    %v1712 = vpop.f32.mrf.mxu0
    %v1713 = vadd.f32 0.0, %v1712
    %1714 = vdwg.mxu0
    %v1715 = vadd.f32 %v1699, %v1711
    %v1716 = vadd.f32 %v1700, %v1713
    %v1717 = vmul.f32 %v1652, 0.5
    %v1718 = vmul.f32 %v1653, 0.5
    %v1719 = vtanh.pop %v1717
    %v1720 = vtanh.pop %v1718
    %v1721 = vmul.f32 %v1719, 0.5
    %v1722 = vmul.f32 %v1720, 0.5
    %v1723 = vadd.f32 %v1721, 0.5
    %v1724 = vadd.f32 %v1722, 0.5
    %v1725 = vmul.f32 %v1673, 0.5
    %v1726 = vmul.f32 %v1674, 0.5
    %v1727 = vtanh.pop %v1725
    %v1728 = vtanh.pop %v1726
    %v1729 = vmul.f32 %v1727, 0.5
    %v1730 = vmul.f32 %v1728, 0.5
    %v1731 = vadd.f32 %v1729, 0.5
    %v1732 = vadd.f32 %v1730, 0.5
    %v1733 = vtanh.pop %v1694
    %v1734 = vtanh.pop %v1695
    %v1735 = vmul.f32 %v1715, 0.5
    %v1736 = vmul.f32 %v1716, 0.5
    %v1737 = vtanh.pop %v1735
    %v1738 = vtanh.pop %v1736
    %v1739 = vmul.f32 %v1737, 0.5
    %v1740 = vmul.f32 %v1738, 0.5
    %v1741 = vadd.f32 %v1739, 0.5
    %v1742 = vadd.f32 %v1740, 0.5
    %v1743 = vmul.f32 %v1731, %v1582
    %v1744 = vmul.f32 %v1732, %v1583
    %v1745 = vmul.f32 %v1723, %v1733
    %v1746 = vmul.f32 %v1724, %v1734
    %v1747 = vadd.f32 %v1743, %v1745
    %v1748 = vadd.f32 %v1744, %v1746
    %v1749 = vtanh.pop %v1747
    %v1750 = vtanh.pop %v1748
    %v1751 = vmul.f32 %v1741, %v1749
    %v1752 = vmul.f32 %v1742, %v1750
    %s1753 = sadd.s32 %s132, 7
    %v1754 = vstv %s1753
    %vm1755 = vcmp.gt.s32.totalorder %v63, %v1754
    %vm1756 = vcmp.gt.s32.totalorder %v64, %v1754
    %v1757 = vsel %vm1755, 1, 0
    %v1758 = vsel %vm1756, 1, 0
    %1759 = vset.pattern.permute.xlu0 0
    %1760 = vperm.xlu0 %1759, %v1757
    %v1761 = vpop.permute.xlu0 %1760
    %1762 = vset.pattern.permute.xlu0 0
    %1763 = vperm.xlu0 %1762, %v1758
    %v1764 = vpop.permute.xlu0 %1763
    %vm1765 = vcmp.eq.s32.totalorder %v1761, 1
    %vm1766 = vcmp.eq.s32.totalorder %v1764, 1
    %v1767 = vsel %vm1765, %v1751, %v1580
    %v1768 = vsel %vm1766, %v1752, %v1581
    %v1769 = vsel %vm1765, %v1747, %v1582
    %v1770 = vsel %vm1766, %v1748, %v1583
    %v1771 = vsel %vm1765, %v1751, 0.0
    %v1772 = vsel %vm1766, %v1752, 0.0
    %v1775 = vrot.slane %v1771, 1
    %v1776 = vrot.slane %v1771, 2
    %v1777 = vrot.slane %v1771, 3
    %v1778 = vrot.slane %v1771, 4
    %v1779 = vrot.slane %v1771, 5
    %v1780 = vrot.slane %v1771, 6
    %v1781 = vrot.slane %v1771, 7
    %v1782 = vrot.slane %v1772, 1
    %v1783 = vrot.slane %v1772, 2
    %v1784 = vrot.slane %v1772, 3
    %v1785 = vrot.slane %v1772, 4
    %v1786 = vrot.slane %v1772, 5
    %v1787 = vrot.slane %v1772, 6
    %v1788 = vrot.slane %v1772, 7
    %1803 = vst [vmem:[#allocation7 + $0x7] sm:$0x1] %v1771
    %1804 = vst [vmem:[#allocation7 + $0xf] sm:$0x1] %v1775
    %1805 = vst [vmem:[#allocation7 + $0x17] sm:$0x1] %v1776
    %1806 = vst [vmem:[#allocation7 + $0x1f] sm:$0x1] %v1777
    %1807 = vst [vmem:[#allocation7 + $0x27] sm:$0x1] %v1778
    %1808 = vst [vmem:[#allocation7 + $0x2f] sm:$0x1] %v1779
    %1809 = vst [vmem:[#allocation7 + $0x37] sm:$0x1] %v1780
    %1810 = vst [vmem:[#allocation7 + $0x3f] sm:$0x1] %v1781
    %1811 = vst [vmem:[#allocation7 + $0x47] sm:$0x1] %v1772
    %1812 = vst [vmem:[#allocation7 + $0x4f] sm:$0x1] %v1782
    %1813 = vst [vmem:[#allocation7 + $0x57] sm:$0x1] %v1783
    %1814 = vst [vmem:[#allocation7 + $0x5f] sm:$0x1] %v1784
    %1815 = vst [vmem:[#allocation7 + $0x67] sm:$0x1] %v1785
    %1816 = vst [vmem:[#allocation7 + $0x6f] sm:$0x1] %v1786
    %1817 = vst [vmem:[#allocation7 + $0x77] sm:$0x1] %v1787
    %1818 = vst [vmem:[#allocation7 + $0x7f] sm:$0x1] %v1788
    %1819 = vst [vmem:[#allocation8] sm:$0xff] %v1767
    %1820 = vst [vmem:[#allocation8 + $0x8] sm:$0xff] %v1768
    %1821 = vst [vmem:[#allocation10] sm:$0xff] %v1769
    %1822 = vst [vmem:[#allocation10 + $0x8] sm:$0xff] %v1770
    // Predicated region
    $region26: #{tpu_custom_call.1} parent=1 // pred_check
      _
    $region27: #{tpu_custom_call.1} parent=1 // pred_check_branch
      %1824 = sbr.rel (0) target = $region29
    $region28: #{tpu_custom_call.1} parent=1 // pred_region
      %1826 = vsyncadd [#allocation4], 0
      %s1827 = sshll.u32 [#allocation7], 4
      %s1828 = int_to_ptr.vmem [resolvable:$true] %s1827
      %s1829 = sshll.u32 %s3, 4
      %s1830 = int_to_ptr.hbm [resolvable:$true] %s1829
      %1835 = dma.vmem_to_hbm [thread:$0]  %s1828, 2048, %s1830, [#allocation4], 128, 128, 8
    $region29: #{tpu_custom_call.1} parent=1 // pred_fallthru
      _
    // Predicated region
    $region30: #{tpu_custom_call.1} parent=1 // pred_check
      _
    $region31: #{tpu_custom_call.1} parent=1 // pred_check_branch
      %1837 = sbr.rel (0) target = $region33
    $region32: #{tpu_custom_call.1} parent=1 // pred_region
      %1839 = vsyncadd [#allocation9], 0
      %s1840 = sshll.u32 [#allocation8], 4
      %s1841 = int_to_ptr.vmem [resolvable:$true] %s1840
      %s1842 = sshll.u32 %s4, 4
      %s1843 = int_to_ptr.hbm [resolvable:$true] %s1842
      %1848 = dma.vmem_to_hbm [thread:$0]  %s1841, 256, %s1843, [#allocation9], 128, 128, 8
    $region33: #{tpu_custom_call.1} parent=1 // pred_fallthru
      _
    // Predicated region
    $region34: #{tpu_custom_call.1} parent=1 // pred_check
      _
    $region35: #{tpu_custom_call.1} parent=1 // pred_check_branch
      %1850 = sbr.rel (0) target = $region37
    $region36: #{tpu_custom_call.1} parent=1 // pred_region
      %1852 = vsyncadd [#allocation9], 0
      %s1853 = sshll.u32 [#allocation10], 4
      %s1854 = int_to_ptr.vmem [resolvable:$true] %s1853
      %s1855 = sshll.u32 %s5, 4
      %s1856 = int_to_ptr.hbm [resolvable:$true] %s1855
      %1861 = dma.vmem_to_hbm [thread:$0]  %s1854, 256, %s1856, [#allocation9], 128, 128, 8
    $region37: #{tpu_custom_call.1} parent=1 // pred_fallthru
      _
    // Predicated region
    $region38: #{tpu_custom_call.1} parent=1 // pred_check
      _
    $region39: #{tpu_custom_call.1} parent=1 // pred_check_branch
      %1863 = sbr.rel (0) target = $region41
    $region40: #{tpu_custom_call.1} parent=1 // pred_region
      %1865 = dma.done [#allocation4], 2048
    $region41: #{tpu_custom_call.1} parent=1 // pred_fallthru
      _
    // Predicated region
    $region42: #{tpu_custom_call.1} parent=1 // pred_check
      _
    $region43: #{tpu_custom_call.1} parent=1 // pred_check_branch
      %1867 = sbr.rel (0) target = $region45
    $region44: #{tpu_custom_call.1} parent=1 // pred_region
      %1869 = dma.done [#allocation9], 256
    $region45: #{tpu_custom_call.1} parent=1 // pred_fallthru
      _
    // Predicated region
    $region46: #{tpu_custom_call.1} parent=1 // pred_check
      _
    $region47: #{tpu_custom_call.1} parent=1 // pred_check_branch
      %1871 = sbr.rel (0) target = $region49
    $region48: #{tpu_custom_call.1} parent=1 // pred_region
      %1873 = dma.done [#allocation9], 256
    $region49: #{tpu_custom_call.1} parent=1 // pred_fallthru
      _
    %1874 = vsyncpa [#allocation3], 1
    %1875 = vsyncpa [#allocation6], 1
    %1876 = vsyncpa [#allocation4], 1
    %1877 = vsyncpa [#allocation9], 1

</llo_original>
